<compile_context>
chip_gen: v7x
topology: tpu7x:2x2x1
jax: 0.10.0
libtpu: 0.0.40
codegen_flags: <defaults>
</compile_context>

<pallas_src>
import jax
import jax.numpy as jnp
from jax.experimental import pallas as pl
from jax.experimental.pallas import tpu as pltpu

N_SLOT = 10
DIM_X = 3
FEAT_DIM = 64          # pointnet feature width expected by FlowSegPrior (dim_x + 64)
FILTER = 128           # FlowSegPrior filter_size
N_HIDDEN = 7           # layer_size=8 -> 1 input layer + 7 hidden layers + output layer
MAX_ROW_TILE = 2048    # upper bound on rows (points) per grid step


def _use_bf16_epilogue():
    """bf16 bias+ReLU epilogue only where the VPU has a bf16 path (v6e / v7x)."""
    try:
        kind = jax.devices()[0].device_kind.lower()
    except Exception:
        return False
    return ("v6" in kind) or ("v7" in kind)


BF16_EPILOGUE = _use_bf16_epilogue()


def _joint_kernel(pc_ref,
                  w_pc_ref, w_feat_ref,
                  b_enc_ref, b_slot_ref, b0_ref,
                  wh_ref, bh_ref, wo_ref, bo_ref,
                  mask_ref, flow_ref):
    f32 = jnp.float32
    bf16 = jnp.bfloat16

    pc = pc_ref[...]                                              # [T, 3] bf16

    # ---- merged pc-consuming matmuls (one MXU pass) ----
    #   lanes [0:128)   -> pc @ w0[:3]   (FlowSegPrior layer-0 contribution)
    #   lanes [128:192) -> pc @ w_enc    (surrogate encoder pre-activation)
    tmp = jnp.dot(pc, w_pc_ref[...], preferred_element_type=f32)  # [T, 192] f32
    feats = jnp.maximum(tmp[:, FILTER:] + b_enc_ref[...], 0.0)    # [T, 64]  f32
    feats_bf = feats.astype(bf16)

    # ---- merged feats-consuming matmuls ----
    #   lanes [0:128)   -> feats @ w0[3:]
    #   lanes [128:138) -> feats @ w_slot  (mask logits)
    tmp2 = jnp.dot(feats_bf, w_feat_ref[...], preferred_element_type=f32)  # [T, 138]

    # ---- 10-slot mask softmax (exact f32) ----
    logits = tmp2[:, FILTER:] + b_slot_ref[...]
    logits = logits - jnp.max(logits, axis=-1, keepdims=True)
    e = jnp.exp(logits)
    mask_ref[...] = e / jnp.sum(e, axis=-1, keepdims=True)

    # ---- FlowSegPrior first layer (concat eliminated via split/merged weights) ----
    x = jnp.maximum(tmp[:, :FILTER] + tmp2[:, :FILTER] + b0_ref[...], 0.0)  # [T,128] f32

    # ---- 7 x (Linear(128,128) + ReLU), then Linear(128,3) ----
    if BF16_EPILOGUE:
        # bf16 bias-add / ReLU epilogue (halves VALU work where the VPU has bf16).
        xb = x.astype(bf16)
        bh_bf = bh_ref[...].astype(bf16)
        for l in range(N_HIDDEN):
            acc = jnp.dot(xb, wh_ref[l], preferred_element_type=f32)
            xb = jnp.maximum(acc.astype(bf16) + bh_bf[l], 0.0)
        y = jnp.dot(xb, wo_ref[...], preferred_element_type=f32) + bo_ref[...]
    else:
        # f32 epilogue (v5e: no bf16 VPU path).
        for l in range(N_HIDDEN):
            x = jnp.maximum(
                jnp.dot(x.astype(bf16), wh_ref[l], preferred_element_type=f32)
                + bh_ref[l], 0.0)
        y = jnp.dot(x.astype(bf16), wo_ref[...], preferred_element_type=f32) + bo_ref[...]

    # ---- flow softmax over last dim (exact f32) ----
    y = y - jnp.max(y, axis=-1, keepdims=True)
    ey = jnp.exp(y)
    flow_ref[...] = ey / jnp.sum(ey, axis=-1, keepdims=True)


def _full_spec(shape):
    """BlockSpec covering a whole (small) parameter array, constant over the grid."""
    nd = len(shape)
    return pl.BlockSpec(shape, lambda i, _nd=nd: (0,) * _nd)


def _pick_row_tile(n_rows):
    """>=2 grid steps when possible (v7x megacore); multiple of 8; capped for pipelining."""
    tile = pl.next_power_of_2(max(pl.cdiv(n_rows, 2), 8))
    return int(min(tile, MAX_ROW_TILE))


@jax.jit
def joint_flow_inst(pc, params):
    """pc: [B, N, 3] float32 -> (mask [B, N, 10], pred_flow [B, N, 3])."""
    B, N, D = pc.shape
    T = B * N
    row_tile = _pick_row_tile(T)
    T_pad = pl.cdiv(T, row_tile) * row_tile

    bf16 = jnp.bfloat16
    pc_flat = pc.reshape(T, D).astype(bf16)          # pc only ever feeds the MXU
    if T_pad != T:
        pc_flat = jnp.concatenate(
            [pc_flat, jnp.zeros((T_pad - T, D), bf16)], axis=0)

    (w_enc, b_enc, w_slot, b_slot, w0, b0, wh, bh, wo, bo) = params

    # Merged bf16 MXU operands (biases stay f32; added after f32 accumulation).
    w_pc = jnp.concatenate([w0[:D], w_enc], axis=1).astype(bf16)      # [3, 192]
    w_feat = jnp.concatenate([w0[D:], w_slot], axis=1).astype(bf16)   # [64, 138]
    wh_b = wh.astype(bf16)                                            # [7, 128, 128]
    wo_b = wo.astype(bf16)                                            # [128, 3]

    grid = (T_pad // row_tile,)
    row_spec = lambda c: pl.BlockSpec((row_tile, c), lambda i: (i, 0))

    in_specs = [
        row_spec(D),                                   # pc
        _full_spec(w_pc.shape), _full_spec(w_feat.shape),
        _full_spec(b_enc.shape), _full_spec(b_slot.shape), _full_spec(b0.shape),
        _full_spec(wh_b.shape), _full_spec(bh.shape),
        _full_spec(wo_b.shape), _full_spec(bo.shape),
    ]
    out_specs = (row_spec(N_SLOT), row_spec(DIM_X))
    out_shape = (jax.ShapeDtypeStruct((T_pad, N_SLOT), jnp.float32),
                 jax.ShapeDtypeStruct((T_pad, DIM_X), jnp.float32))

    mask, flow = pl.pallas_call(
        _joint_kernel,
        out_shape=out_shape,
        grid_spec=pltpu.PrefetchScalarGridSpec(
            num_scalar_prefetch=0,
            grid=grid,
            in_specs=in_specs,
            out_specs=out_specs,
        ),
        compiler_params=pltpu.CompilerParams(
            dimension_semantics=("parallel",),
            vmem_limit_bytes=32 * 1024 * 1024),
    )(pc_flat, w_pc, w_feat, b_enc, b_slot, b0, wh_b, bh, wo_b, bo)

    mask = mask[:T].reshape(B, N, N_SLOT)
    flow = flow[:T].reshape(B, N, DIM_X)
    return mask, flow


# -------------------- deterministic parameter init (xavier-uniform-ish) --------------------
def _xavier(key, fan_in, fan_out, shape):
    a = jnp.sqrt(6.0 / (fan_in + fan_out))
    return jax.random.uniform(key, shape, jnp.float32, minval=-a, maxval=a)


def make_params(key):
    ks = jax.random.split(key, 12)
    w_enc = _xavier(ks[0], DIM_X, FEAT_DIM, (DIM_X, FEAT_DIM))
    b_enc = jnp.zeros((1, FEAT_DIM), jnp.float32)
    w_slot = _xavier(ks[1], FEAT_DIM, N_SLOT, (FEAT_DIM, N_SLOT))
    b_slot = jnp.zeros((1, N_SLOT), jnp.float32)

    w0 = _xavier(ks[2], DIM_X + FEAT_DIM, FILTER, (DIM_X + FEAT_DIM, FILTER))
    b0 = jnp.zeros((1, FILTER), jnp.float32)
    wh = jnp.stack([_xavier(ks[3 + l], FILTER, FILTER, (FILTER, FILTER))
                    for l in range(N_HIDDEN)], axis=0)          # [7, 128, 128]
    bh = jnp.zeros((N_HIDDEN, 1, FILTER), jnp.float32)
    wo = _xavier(ks[11], FILTER, DIM_X, (FILTER, DIM_X))
    bo = jnp.zeros((1, DIM_X), jnp.float32)
    return (w_enc, b_enc, w_slot, b_slot, w0, b0, wh, bh, wo, bo)


# -------------------- pure-JAX reference (same mixed-precision recipe) --------------------
def reference(pc, params, bf16_epilogue):
    (w_enc, b_enc, w_slot, b_slot, w0, b0, wh, bh, wo, bo) = params
    bf16, f32 = jnp.bfloat16, jnp.float32
    dot = lambda a, b: jnp.dot(a.astype(bf16), b.astype(bf16), preferred_element_type=f32)

    pc = pc.astype(bf16)
    feats = jax.nn.relu(dot(pc, w_enc) + b_enc)
    mask = jax.nn.softmax(dot(feats, w_slot) + b_slot, axis=-1)

    x = jax.nn.relu(dot(pc, w0[:DIM_X]) + dot(feats, w0[DIM_X:]) + b0)
    if bf16_epilogue:
        x = x.astype(bf16)
        for l in range(N_HIDDEN):
            x = jax.nn.relu(dot(x, wh[l]).astype(bf16) + bh[l].astype(bf16))
    else:
        for l in range(N_HIDDEN):
            x = jax.nn.relu(dot(x, wh[l]) + bh[l])
    flow = jax.nn.softmax(dot(x, wo) + bo, axis=-1)
    return mask, flow


if __name__ == "__main__":
    key = jax.random.PRNGKey(0)
    pkey, xkey = jax.random.split(key)
    params = make_params(pkey)

    B, N = 2, 128                       # small shapes: 2 clouds of 128 points, 3-d coords
    pc = jax.random.normal(xkey, (B, N, DIM_X), jnp.float32)

    mask, pred_flow = joint_flow_inst(pc, params)
    jax.block_until_ready((mask, pred_flow))

    mask_ref, flow_ref = reference(pc, params, BF16_EPILOGUE)
    assert mask.shape == (B, N, N_SLOT) and pred_flow.shape == (B, N, DIM_X)
    assert jnp.allclose(mask, mask_ref, atol=1e-2, rtol=1e-2)
    assert jnp.allclose(pred_flow, flow_ref, atol=1e-2, rtol=1e-2)
    # softmax outputs must sum to 1 (exact f32 softmax in the kernel)
    assert jnp.allclose(jnp.sum(mask, axis=-1), 1.0, atol=1e-3)
    assert jnp.allclose(jnp.sum(pred_flow, axis=-1), 1.0, atol=1e-3)

    print("KERNEL_OK")
</pallas_src>

<mosaic_0001>
module attributes {stable_mosaic.version = 11 : i64} {
  func.func @_joint_kernel(%arg0: i32, %arg1: memref<128x3xbf16, #tpu.memory_space<vmem>>, %arg2: memref<3x192xbf16, #tpu.memory_space<vmem>>, %arg3: memref<64x138xbf16, #tpu.memory_space<vmem>>, %arg4: memref<1x64xf32, #tpu.memory_space<vmem>>, %arg5: memref<1x10xf32, #tpu.memory_space<vmem>>, %arg6: memref<1x128xf32, #tpu.memory_space<vmem>>, %arg7: memref<7x128x128xbf16, #tpu.memory_space<vmem>>, %arg8: memref<7x1x128xf32, #tpu.memory_space<vmem>>, %arg9: memref<128x3xbf16, #tpu.memory_space<vmem>>, %arg10: memref<1x3xf32, #tpu.memory_space<vmem>>, %arg11: memref<128x10xf32, #tpu.memory_space<vmem>>, %arg12: memref<128x3xf32, #tpu.memory_space<vmem>>) attributes {dimension_semantics = [#tpu.dimension_semantics<parallel>], iteration_bounds = array<i64: 2>, scalar_prefetch = 0 : i64, scratch_operands = 0 : i64, tpu.core_type = #tpu.core_type<tc>, window_params = [{transform_indices = @transform_0, window_bounds = array<i64: 128, 3>}, {pipeline_mode = #tpu.pipeline_mode<synchronous>, transform_indices = @transform_1, window_bounds = array<i64: 3, 192>}, {pipeline_mode = #tpu.pipeline_mode<synchronous>, transform_indices = @transform_2, window_bounds = array<i64: 64, 138>}, {pipeline_mode = #tpu.pipeline_mode<synchronous>, transform_indices = @transform_3, window_bounds = array<i64: 1, 64>}, {pipeline_mode = #tpu.pipeline_mode<synchronous>, transform_indices = @transform_4, window_bounds = array<i64: 1, 10>}, {pipeline_mode = #tpu.pipeline_mode<synchronous>, transform_indices = @transform_5, window_bounds = array<i64: 1, 128>}, {pipeline_mode = #tpu.pipeline_mode<synchronous>, transform_indices = @transform_6, window_bounds = array<i64: 7, 128, 128>}, {pipeline_mode = #tpu.pipeline_mode<synchronous>, transform_indices = @transform_7, window_bounds = array<i64: 7, 1, 128>}, {pipeline_mode = #tpu.pipeline_mode<synchronous>, transform_indices = @transform_8, window_bounds = array<i64: 128, 3>}, {pipeline_mode = #tpu.pipeline_mode<synchronous>, transform_indices = @transform_9, window_bounds = array<i64: 1, 3>}, {transform_indices = @transform_10, window_bounds = array<i64: 128, 10>}, {transform_indices = @transform_11, window_bounds = array<i64: 128, 3>}]} {
    %c0 = arith.constant 0 : index
    %c0_0 = arith.constant 0 : index
    %0 = vector.load %arg1[%c0, %c0_0] : memref<128x3xbf16, #tpu.memory_space<vmem>>, vector<128x3xbf16>
    %c0_1 = arith.constant 0 : index
    %c0_2 = arith.constant 0 : index
    %1 = vector.load %arg2[%c0_1, %c0_2] : memref<3x192xbf16, #tpu.memory_space<vmem>>, vector<3x192xbf16>
    %cst = arith.constant dense<0.000000e+00> : vector<128x192xf32>
    %2 = tpu.matmul %0, %1, %cst {dimension_numbers = #tpu.dot_dimension_numbers<[1], [0], [0], [1], [0, 0, 1, 1], [], []>} : vector<128x3xbf16>, vector<3x192xbf16>, vector<128x192xf32> -> vector<128x192xf32>
    %3 = vector.extract_strided_slice %2 {offsets = [0, 128], sizes = [128, 64], strides = [1, 1]} : vector<128x192xf32> to vector<128x64xf32>
    %c0_3 = arith.constant 0 : index
    %c0_4 = arith.constant 0 : index
    %4 = vector.load %arg4[%c0_3, %c0_4] : memref<1x64xf32, #tpu.memory_space<vmem>>, vector<1x64xf32>
    %5 = vector.broadcast %4 : vector<1x64xf32> to vector<128x64xf32>
    %6 = arith.addf %3, %5 : vector<128x64xf32>
    %cst_5 = arith.constant 0.000000e+00 : f32
    %7 = vector.broadcast %cst_5 : f32 to vector<128x64xf32>
    %8 = arith.maximumf %6, %7 : vector<128x64xf32>
    %9 = arith.truncf %8 : vector<128x64xf32> to vector<128x64xbf16>
    %c0_6 = arith.constant 0 : index
    %c0_7 = arith.constant 0 : index
    %10 = vector.load %arg3[%c0_6, %c0_7] : memref<64x138xbf16, #tpu.memory_space<vmem>>, vector<64x138xbf16>
    %cst_8 = arith.constant dense<0.000000e+00> : vector<128x138xf32>
    %11 = tpu.matmul %9, %10, %cst_8 {dimension_numbers = #tpu.dot_dimension_numbers<[1], [0], [0], [1], [0, 0, 1, 1], [], []>} : vector<128x64xbf16>, vector<64x138xbf16>, vector<128x138xf32> -> vector<128x138xf32>
    %12 = vector.extract_strided_slice %11 {offsets = [0, 128], sizes = [128, 10], strides = [1, 1]} : vector<128x138xf32> to vector<128x10xf32>
    %c0_9 = arith.constant 0 : index
    %c0_10 = arith.constant 0 : index
    %13 = vector.load %arg5[%c0_9, %c0_10] : memref<1x10xf32, #tpu.memory_space<vmem>>, vector<1x10xf32>
    %14 = vector.broadcast %13 : vector<1x10xf32> to vector<128x10xf32>
    %15 = arith.addf %12, %14 : vector<128x10xf32>
    %cst_11 = arith.constant dense<0xFF800000> : vector<128xf32>
    %16 = vector.multi_reduction <maximumf>, %15, %cst_11 [1] : vector<128x10xf32> to vector<128xf32>
    %17 = vector.shape_cast %16 : vector<128xf32> to vector<128x1xf32>
    %18 = vector.broadcast %17 : vector<128x1xf32> to vector<128x10xf32>
    %19 = arith.subf %15, %18 : vector<128x10xf32>
    %20 = math.exp %19 : vector<128x10xf32>
    %cst_12 = arith.constant dense<0.000000e+00> : vector<128xf32>
    %21 = vector.multi_reduction <add>, %20, %cst_12 [1] : vector<128x10xf32> to vector<128xf32>
    %22 = vector.shape_cast %21 : vector<128xf32> to vector<128x1xf32>
    %23 = vector.broadcast %22 : vector<128x1xf32> to vector<128x10xf32>
    %24 = arith.divf %20, %23 : vector<128x10xf32>
    %c0_13 = arith.constant 0 : index
    %c0_14 = arith.constant 0 : index
    %25 = vector.load %arg11[%c0_13, %c0_14] : memref<128x10xf32, #tpu.memory_space<vmem>>, vector<128x10xf32>
    tpu.vector_store %arg11[%c0_13, %c0_14], %24 {strides = array<i32>} : memref<128x10xf32, #tpu.memory_space<vmem>>, vector<128x10xf32>,
    %26 = vector.extract_strided_slice %2 {offsets = [0, 0], sizes = [128, 128], strides = [1, 1]} : vector<128x192xf32> to vector<128x128xf32>
    %27 = vector.extract_strided_slice %11 {offsets = [0, 0], sizes = [128, 128], strides = [1, 1]} : vector<128x138xf32> to vector<128x128xf32>
    %28 = arith.addf %26, %27 : vector<128x128xf32>
    %c0_15 = arith.constant 0 : index
    %c0_16 = arith.constant 0 : index
    %29 = vector.load %arg6[%c0_15, %c0_16] : memref<1x128xf32, #tpu.memory_space<vmem>>, vector<1x128xf32>
    %30 = vector.broadcast %29 : vector<1x128xf32> to vector<128x128xf32>
    %31 = arith.addf %28, %30 : vector<128x128xf32>
    %cst_17 = arith.constant 0.000000e+00 : f32
    %32 = vector.broadcast %cst_17 : f32 to vector<128x128xf32>
    %33 = arith.maximumf %31, %32 : vector<128x128xf32>
    %34 = arith.truncf %33 : vector<128x128xf32> to vector<128x128xbf16>
    %c0_18 = arith.constant 0 : index
    %c0_19 = arith.constant 0 : index
    %c0_20 = arith.constant 0 : index
    %35 = vector.load %arg7[%c0_18, %c0_19, %c0_20] : memref<7x128x128xbf16, #tpu.memory_space<vmem>>, vector<1x128x128xbf16>
    %36 = vector.shape_cast %35 : vector<1x128x128xbf16> to vector<128x128xbf16>
    %cst_21 = arith.constant dense<0.000000e+00> : vector<128x128xf32>
    %37 = tpu.matmul %34, %36, %cst_21 {dimension_numbers = #tpu.dot_dimension_numbers<[1], [0], [0], [1], [0, 0, 1, 1], [], []>} : vector<128x128xbf16>, vector<128x128xbf16>, vector<128x128xf32> -> vector<128x128xf32>
    %c0_22 = arith.constant 0 : index
    %c0_23 = arith.constant 0 : index
    %c0_24 = arith.constant 0 : index
    %38 = vector.load %arg8[%c0_22, %c0_23, %c0_24] : memref<7x1x128xf32, #tpu.memory_space<vmem>>, vector<1x1x128xf32>
    %39 = vector.shape_cast %38 : vector<1x1x128xf32> to vector<1x128xf32>
    %40 = vector.broadcast %39 : vector<1x128xf32> to vector<128x128xf32>
    %41 = arith.addf %37, %40 : vector<128x128xf32>
    %cst_25 = arith.constant 0.000000e+00 : f32
    %42 = vector.broadcast %cst_25 : f32 to vector<128x128xf32>
    %43 = arith.maximumf %41, %42 : vector<128x128xf32>
    %44 = arith.truncf %43 : vector<128x128xf32> to vector<128x128xbf16>
    %c1 = arith.constant 1 : index
    %c0_26 = arith.constant 0 : index
    %c0_27 = arith.constant 0 : index
    %45 = vector.load %arg7[%c1, %c0_26, %c0_27] : memref<7x128x128xbf16, #tpu.memory_space<vmem>>, vector<1x128x128xbf16>
    %46 = vector.shape_cast %45 : vector<1x128x128xbf16> to vector<128x128xbf16>
    %cst_28 = arith.constant dense<0.000000e+00> : vector<128x128xf32>
    %47 = tpu.matmul %44, %46, %cst_28 {dimension_numbers = #tpu.dot_dimension_numbers<[1], [0], [0], [1], [0, 0, 1, 1], [], []>} : vector<128x128xbf16>, vector<128x128xbf16>, vector<128x128xf32> -> vector<128x128xf32>
    %c1_29 = arith.constant 1 : index
    %c0_30 = arith.constant 0 : index
    %c0_31 = arith.constant 0 : index
    %48 = vector.load %arg8[%c1_29, %c0_30, %c0_31] : memref<7x1x128xf32, #tpu.memory_space<vmem>>, vector<1x1x128xf32>
    %49 = vector.shape_cast %48 : vector<1x1x128xf32> to vector<1x128xf32>
    %50 = vector.broadcast %49 : vector<1x128xf32> to vector<128x128xf32>
    %51 = arith.addf %47, %50 : vector<128x128xf32>
    %cst_32 = arith.constant 0.000000e+00 : f32
    %52 = vector.broadcast %cst_32 : f32 to vector<128x128xf32>
    %53 = arith.maximumf %51, %52 : vector<128x128xf32>
    %54 = arith.truncf %53 : vector<128x128xf32> to vector<128x128xbf16>
    %c2 = arith.constant 2 : index
    %c0_33 = arith.constant 0 : index
    %c0_34 = arith.constant 0 : index
    %55 = vector.load %arg7[%c2, %c0_33, %c0_34] : memref<7x128x128xbf16, #tpu.memory_space<vmem>>, vector<1x128x128xbf16>
    %56 = vector.shape_cast %55 : vector<1x128x128xbf16> to vector<128x128xbf16>
    %cst_35 = arith.constant dense<0.000000e+00> : vector<128x128xf32>
    %57 = tpu.matmul %54, %56, %cst_35 {dimension_numbers = #tpu.dot_dimension_numbers<[1], [0], [0], [1], [0, 0, 1, 1], [], []>} : vector<128x128xbf16>, vector<128x128xbf16>, vector<128x128xf32> -> vector<128x128xf32>
    %c2_36 = arith.constant 2 : index
    %c0_37 = arith.constant 0 : index
    %c0_38 = arith.constant 0 : index
    %58 = vector.load %arg8[%c2_36, %c0_37, %c0_38] : memref<7x1x128xf32, #tpu.memory_space<vmem>>, vector<1x1x128xf32>
    %59 = vector.shape_cast %58 : vector<1x1x128xf32> to vector<1x128xf32>
    %60 = vector.broadcast %59 : vector<1x128xf32> to vector<128x128xf32>
    %61 = arith.addf %57, %60 : vector<128x128xf32>
    %cst_39 = arith.constant 0.000000e+00 : f32
    %62 = vector.broadcast %cst_39 : f32 to vector<128x128xf32>
    %63 = arith.maximumf %61, %62 : vector<128x128xf32>
    %64 = arith.truncf %63 : vector<128x128xf32> to vector<128x128xbf16>
    %c3 = arith.constant 3 : index
    %c0_40 = arith.constant 0 : index
    %c0_41 = arith.constant 0 : index
    %65 = vector.load %arg7[%c3, %c0_40, %c0_41] : memref<7x128x128xbf16, #tpu.memory_space<vmem>>, vector<1x128x128xbf16>
    %66 = vector.shape_cast %65 : vector<1x128x128xbf16> to vector<128x128xbf16>
    %cst_42 = arith.constant dense<0.000000e+00> : vector<128x128xf32>
    %67 = tpu.matmul %64, %66, %cst_42 {dimension_numbers = #tpu.dot_dimension_numbers<[1], [0], [0], [1], [0, 0, 1, 1], [], []>} : vector<128x128xbf16>, vector<128x128xbf16>, vector<128x128xf32> -> vector<128x128xf32>
    %c3_43 = arith.constant 3 : index
    %c0_44 = arith.constant 0 : index
    %c0_45 = arith.constant 0 : index
    %68 = vector.load %arg8[%c3_43, %c0_44, %c0_45] : memref<7x1x128xf32, #tpu.memory_space<vmem>>, vector<1x1x128xf32>
    %69 = vector.shape_cast %68 : vector<1x1x128xf32> to vector<1x128xf32>
    %70 = vector.broadcast %69 : vector<1x128xf32> to vector<128x128xf32>
    %71 = arith.addf %67, %70 : vector<128x128xf32>
    %cst_46 = arith.constant 0.000000e+00 : f32
    %72 = vector.broadcast %cst_46 : f32 to vector<128x128xf32>
    %73 = arith.maximumf %71, %72 : vector<128x128xf32>
    %74 = arith.truncf %73 : vector<128x128xf32> to vector<128x128xbf16>
    %c4 = arith.constant 4 : index
    %c0_47 = arith.constant 0 : index
    %c0_48 = arith.constant 0 : index
    %75 = vector.load %arg7[%c4, %c0_47, %c0_48] : memref<7x128x128xbf16, #tpu.memory_space<vmem>>, vector<1x128x128xbf16>
    %76 = vector.shape_cast %75 : vector<1x128x128xbf16> to vector<128x128xbf16>
    %cst_49 = arith.constant dense<0.000000e+00> : vector<128x128xf32>
    %77 = tpu.matmul %74, %76, %cst_49 {dimension_numbers = #tpu.dot_dimension_numbers<[1], [0], [0], [1], [0, 0, 1, 1], [], []>} : vector<128x128xbf16>, vector<128x128xbf16>, vector<128x128xf32> -> vector<128x128xf32>
    %c4_50 = arith.constant 4 : index
    %c0_51 = arith.constant 0 : index
    %c0_52 = arith.constant 0 : index
    %78 = vector.load %arg8[%c4_50, %c0_51, %c0_52] : memref<7x1x128xf32, #tpu.memory_space<vmem>>, vector<1x1x128xf32>
    %79 = vector.shape_cast %78 : vector<1x1x128xf32> to vector<1x128xf32>
    %80 = vector.broadcast %79 : vector<1x128xf32> to vector<128x128xf32>
    %81 = arith.addf %77, %80 : vector<128x128xf32>
    %cst_53 = arith.constant 0.000000e+00 : f32
    %82 = vector.broadcast %cst_53 : f32 to vector<128x128xf32>
    %83 = arith.maximumf %81, %82 : vector<128x128xf32>
    %84 = arith.truncf %83 : vector<128x128xf32> to vector<128x128xbf16>
    %c5 = arith.constant 5 : index
    %c0_54 = arith.constant 0 : index
    %c0_55 = arith.constant 0 : index
    %85 = vector.load %arg7[%c5, %c0_54, %c0_55] : memref<7x128x128xbf16, #tpu.memory_space<vmem>>, vector<1x128x128xbf16>
    %86 = vector.shape_cast %85 : vector<1x128x128xbf16> to vector<128x128xbf16>
    %cst_56 = arith.constant dense<0.000000e+00> : vector<128x128xf32>
    %87 = tpu.matmul %84, %86, %cst_56 {dimension_numbers = #tpu.dot_dimension_numbers<[1], [0], [0], [1], [0, 0, 1, 1], [], []>} : vector<128x128xbf16>, vector<128x128xbf16>, vector<128x128xf32> -> vector<128x128xf32>
    %c5_57 = arith.constant 5 : index
    %c0_58 = arith.constant 0 : index
    %c0_59 = arith.constant 0 : index
    %88 = vector.load %arg8[%c5_57, %c0_58, %c0_59] : memref<7x1x128xf32, #tpu.memory_space<vmem>>, vector<1x1x128xf32>
    %89 = vector.shape_cast %88 : vector<1x1x128xf32> to vector<1x128xf32>
    %90 = vector.broadcast %89 : vector<1x128xf32> to vector<128x128xf32>
    %91 = arith.addf %87, %90 : vector<128x128xf32>
    %cst_60 = arith.constant 0.000000e+00 : f32
    %92 = vector.broadcast %cst_60 : f32 to vector<128x128xf32>
    %93 = arith.maximumf %91, %92 : vector<128x128xf32>
    %94 = arith.truncf %93 : vector<128x128xf32> to vector<128x128xbf16>
    %c6 = arith.constant 6 : index
    %c0_61 = arith.constant 0 : index
    %c0_62 = arith.constant 0 : index
    %95 = vector.load %arg7[%c6, %c0_61, %c0_62] : memref<7x128x128xbf16, #tpu.memory_space<vmem>>, vector<1x128x128xbf16>
    %96 = vector.shape_cast %95 : vector<1x128x128xbf16> to vector<128x128xbf16>
    %cst_63 = arith.constant dense<0.000000e+00> : vector<128x128xf32>
    %97 = tpu.matmul %94, %96, %cst_63 {dimension_numbers = #tpu.dot_dimension_numbers<[1], [0], [0], [1], [0, 0, 1, 1], [], []>} : vector<128x128xbf16>, vector<128x128xbf16>, vector<128x128xf32> -> vector<128x128xf32>
    %c6_64 = arith.constant 6 : index
    %c0_65 = arith.constant 0 : index
    %c0_66 = arith.constant 0 : index
    %98 = vector.load %arg8[%c6_64, %c0_65, %c0_66] : memref<7x1x128xf32, #tpu.memory_space<vmem>>, vector<1x1x128xf32>
    %99 = vector.shape_cast %98 : vector<1x1x128xf32> to vector<1x128xf32>
    %100 = vector.broadcast %99 : vector<1x128xf32> to vector<128x128xf32>
    %101 = arith.addf %97, %100 : vector<128x128xf32>
    %cst_67 = arith.constant 0.000000e+00 : f32
    %102 = vector.broadcast %cst_67 : f32 to vector<128x128xf32>
    %103 = arith.maximumf %101, %102 : vector<128x128xf32>
    %104 = arith.truncf %103 : vector<128x128xf32> to vector<128x128xbf16>
    %c0_68 = arith.constant 0 : index
    %c0_69 = arith.constant 0 : index
    %105 = vector.load %arg9[%c0_68, %c0_69] : memref<128x3xbf16, #tpu.memory_space<vmem>>, vector<128x3xbf16>
    %cst_70 = arith.constant dense<0.000000e+00> : vector<128x3xf32>
    %106 = tpu.matmul %104, %105, %cst_70 {dimension_numbers = #tpu.dot_dimension_numbers<[1], [0], [0], [1], [0, 0, 1, 1], [], []>} : vector<128x128xbf16>, vector<128x3xbf16>, vector<128x3xf32> -> vector<128x3xf32>
    %c0_71 = arith.constant 0 : index
    %c0_72 = arith.constant 0 : index
    %107 = vector.load %arg10[%c0_71, %c0_72] : memref<1x3xf32, #tpu.memory_space<vmem>>, vector<1x3xf32>
    %108 = vector.broadcast %107 : vector<1x3xf32> to vector<128x3xf32>
    %109 = arith.addf %106, %108 : vector<128x3xf32>
    %cst_73 = arith.constant dense<0xFF800000> : vector<128xf32>
    %110 = vector.multi_reduction <maximumf>, %109, %cst_73 [1] : vector<128x3xf32> to vector<128xf32>
    %111 = vector.shape_cast %110 : vector<128xf32> to vector<128x1xf32>
    %112 = vector.broadcast %111 : vector<128x1xf32> to vector<128x3xf32>
    %113 = arith.subf %109, %112 : vector<128x3xf32>
    %114 = math.exp %113 : vector<128x3xf32>
    %cst_74 = arith.constant dense<0.000000e+00> : vector<128xf32>
    %115 = vector.multi_reduction <add>, %114, %cst_74 [1] : vector<128x3xf32> to vector<128xf32>
    %116 = vector.shape_cast %115 : vector<128xf32> to vector<128x1xf32>
    %117 = vector.broadcast %116 : vector<128x1xf32> to vector<128x3xf32>
    %118 = arith.divf %114, %117 : vector<128x3xf32>
    %c0_75 = arith.constant 0 : index
    %c0_76 = arith.constant 0 : index
    %119 = vector.load %arg12[%c0_75, %c0_76] : memref<128x3xf32, #tpu.memory_space<vmem>>, vector<128x3xf32>
    tpu.vector_store %arg12[%c0_75, %c0_76], %118 {strides = array<i32>} : memref<128x3xf32, #tpu.memory_space<vmem>>, vector<128x3xf32>,
    return
  }
  func.func @transform_0(%arg0: i32) -> (i32, i32) {
    %c0_i32 = arith.constant 0 : i32
    %c0_i32_0 = arith.constant 0 : i32
    return %arg0, %c0_i32 : i32, i32
  }
  func.func @transform_1(%arg0: i32) -> (i32, i32) {
    %c0_i32 = arith.constant 0 : i32
    %c0_i32_0 = arith.constant 0 : i32
    %c0_i32_1 = arith.constant 0 : i32
    return %c0_i32, %c0_i32_0 : i32, i32
  }
  func.func @transform_2(%arg0: i32) -> (i32, i32) {
    %c0_i32 = arith.constant 0 : i32
    %c0_i32_0 = arith.constant 0 : i32
    %c0_i32_1 = arith.constant 0 : i32
    return %c0_i32, %c0_i32_0 : i32, i32
  }
  func.func @transform_3(%arg0: i32) -> (i32, i32) {
    %c0_i32 = arith.constant 0 : i32
    %c0_i32_0 = arith.constant 0 : i32
    %c0_i32_1 = arith.constant 0 : i32
    return %c0_i32, %c0_i32_0 : i32, i32
  }
  func.func @transform_4(%arg0: i32) -> (i32, i32) {
    %c0_i32 = arith.constant 0 : i32
    %c0_i32_0 = arith.constant 0 : i32
    %c0_i32_1 = arith.constant 0 : i32
    return %c0_i32, %c0_i32_0 : i32, i32
  }
  func.func @transform_5(%arg0: i32) -> (i32, i32) {
    %c0_i32 = arith.constant 0 : i32
    %c0_i32_0 = arith.constant 0 : i32
    %c0_i32_1 = arith.constant 0 : i32
    return %c0_i32, %c0_i32_0 : i32, i32
  }
  func.func @transform_6(%arg0: i32) -> (i32, i32, i32) {
    %c0_i32 = arith.constant 0 : i32
    %c0_i32_0 = arith.constant 0 : i32
    %c0_i32_1 = arith.constant 0 : i32
    %c0_i32_2 = arith.constant 0 : i32
    return %c0_i32, %c0_i32_0, %c0_i32_1 : i32, i32, i32
  }
  func.func @transform_7(%arg0: i32) -> (i32, i32, i32) {
    %c0_i32 = arith.constant 0 : i32
    %c0_i32_0 = arith.constant 0 : i32
    %c0_i32_1 = arith.constant 0 : i32
    %c0_i32_2 = arith.constant 0 : i32
    return %c0_i32, %c0_i32_0, %c0_i32_1 : i32, i32, i32
  }
  func.func @transform_8(%arg0: i32) -> (i32, i32) {
    %c0_i32 = arith.constant 0 : i32
    %c0_i32_0 = arith.constant 0 : i32
    %c0_i32_1 = arith.constant 0 : i32
    return %c0_i32, %c0_i32_0 : i32, i32
  }
  func.func @transform_9(%arg0: i32) -> (i32, i32) {
    %c0_i32 = arith.constant 0 : i32
    %c0_i32_0 = arith.constant 0 : i32
    %c0_i32_1 = arith.constant 0 : i32
    return %c0_i32, %c0_i32_0 : i32, i32
  }
  func.func @transform_10(%arg0: i32) -> (i32, i32) {
    %c0_i32 = arith.constant 0 : i32
    %c0_i32_0 = arith.constant 0 : i32
    return %arg0, %c0_i32 : i32, i32
  }
  func.func @transform_11(%arg0: i32) -> (i32, i32) {
    %c0_i32 = arith.constant 0 : i32
    %c0_i32_0 = arith.constant 0 : i32
    return %arg0, %c0_i32 : i32, i32
  }
}

</mosaic_0001>

<llo_original>
// kernel: joint_flow_inst.1
$region0: #{joint_flow_inst.1}
  #allocation0 [shape = 'u32[]', space=smem, size = 0x4, offset = 0x4, fixed_abs, tag = 'smem constant byte address 0x4 - core index']
  #allocation1 [shape = 'u32[144,128]{1,0:T(1,128)}', space=vmem, size = 0x12000, scoped, tag = 'internal scratch']
  %s0 = inlined_call_operand.vmem [shape: bf16[256,3], index: 0, kind: input, shape index: {}]
  %s1 = inlined_call_operand.vmem [shape: bf16[3,192], index: 1, kind: input, shape index: {}]
  %s2 = inlined_call_operand.vmem [shape: bf16[64,138], index: 2, kind: input, shape index: {}]
  %s3 = inlined_call_operand.vmem [shape: f32[1,64], index: 3, kind: input, shape index: {}]
  %s4 = inlined_call_operand.vmem [shape: f32[1,10], index: 4, kind: input, shape index: {}]
  %s5 = inlined_call_operand.vmem [shape: f32[1,128], index: 5, kind: input, shape index: {}]
  %s6 = inlined_call_operand.vmem [shape: bf16[7,128,128], index: 6, kind: input, shape index: {}]
  %s7 = inlined_call_operand.vmem [shape: f32[7,1,128], index: 7, kind: input, shape index: {}]
  %s8 = inlined_call_operand.vmem [shape: bf16[128,3], index: 8, kind: input, shape index: {}]
  %s9 = inlined_call_operand.vmem [shape: f32[1,3], index: 9, kind: input, shape index: {}]
  %s10 = inlined_call_operand.vmem [shape: f32[256,10], index: 10, kind: output, shape index: {0}]
  %s11 = inlined_call_operand.vmem [shape: f32[256,3], index: 11, kind: output, shape index: {1}]
  %12 = xla_tuple %s10, %s11
  %s13 = sld [smem:[#allocation0]]
  $region81: #{joint_flow_inst.1} parent=0
    _
  %s15 = ssub.s32 1, %s13
  %s16 = scalar_select 0, %s15, %s13
  loop: start=0, step=1, limit=4
  $region2: #{joint_flow_inst.1} parent=0 // loop_pre_header
    _
  $region3: #{joint_flow_inst.1} parent=0 // loop_header
    %s18 = sphi 0, %s22
    %p19 = scmp.ge.s32.totalorder %s18, 4
    %s28 = sphi 0, %s30
    %s31 = sphi 0, %s28
    %s32 = sphi 0, %s31
    %s48 = sphi 0, %s32
    %s52 = sphi 0, %s52
    %s54 = sphi 0, %s52
    %s55 = sphi 0, %s54
    %s69 = sphi 0, %s55
    %s73 = sphi 0, %s73
    %s75 = sphi 0, %s73
    %s76 = sphi 0, %s75
    %s90 = sphi 0, %s76
    %s94 = sphi 0, %s94
    %s96 = sphi 0, %s94
    %s97 = sphi 0, %s96
    %s111 = sphi 0, %s97
    %s115 = sphi 0, %s115
    %s117 = sphi 0, %s115
    %s118 = sphi 0, %s117
    %s132 = sphi 0, %s118
    %s136 = sphi 0, %s136
    %s138 = sphi 0, %s136
    %s139 = sphi 0, %s138
    %s153 = sphi 0, %s139
    %s157 = sphi 0, %s157
    %s159 = sphi 0, %s157
    %s160 = sphi 0, %s159
    %s174 = sphi 0, %s160
    %s178 = sphi 0, %s178
    %s180 = sphi 0, %s178
    %s181 = sphi 0, %s180
    %s195 = sphi 0, %s181
    %s199 = sphi 0, %s199
    %s201 = sphi 0, %s199
    %s202 = sphi 0, %s201
    %s216 = sphi 0, %s202
    %s220 = sphi 0, %s220
    %s222 = sphi 0, %s220
    %s223 = sphi 0, %s222
    %s237 = sphi 0, %s223
    %s243 = sphi 0, %s245
    %s246 = sphi 0, %s243
    %s247 = sphi 0, %s246
    %s263 = sphi 0, %s247
    %s269 = sphi 0, %s271
    %s272 = sphi 0, %s269
    %s273 = sphi 0, %s272
    %s289 = sphi 0, %s273
  $region4: #{joint_flow_inst.1} parent=0 // loop_header_branch
    %21 = sbr.rel (%p19) target = $region8
  $region5: #{joint_flow_inst.1} parent=0 // loop_body
    %s23 = ssub.s32 %s18, 1
    %s24 = ssub.s32 %s18, 2
    %s25 = sadd.s32 %s18, 1
    %s26 = ssub.s32 %s18, %s25
    %p27 = scmp.eq.s32.totalorder %s26, 0
    %s29 = sadd.s32 %s28, 1
    %s30 = scalar_select %p27, %s28, %s29
    %p33 = pneg %p27
    %p34 = scmp.eq.s32.totalorder %s18, 1
    %p35 = por %p33, %p34
    %p36 = scmp.ne.s32.totalorder %s28, %s31
    %p37 = scmp.eq.s32.totalorder %s18, 0
    %p38 = por %p36, %p37
    %p39 = scmp.ne.s32.totalorder %s28, %s31
    %p40 = scmp.eq.s32.totalorder %s23, 1
    %p41 = por %p39, %p40
    %p42 = scmp.ne.s32.totalorder %s31, %s32
    %p43 = scmp.eq.s32.totalorder %s23, 0
    %p44 = por %p42, %p43
    %p45 = scmp.ne.s32.totalorder %s31, %s32
    %p46 = scmp.eq.s32.totalorder %s24, 1
    %p47 = por %p45, %p46
    %p49 = scmp.ne.s32.totalorder %s32, %s48
    %p50 = scmp.eq.s32.totalorder %s24, 0
    %p51 = por %p49, %p50
    %s53 = sadd.s32 %s52, 1
    %p56 = scmp.eq.s32.totalorder %s18, 1
    %p57 = scmp.ne.s32.totalorder %s52, %s54
    %p58 = scmp.eq.s32.totalorder %s18, 0
    %p59 = por %p57, %p58
    %p60 = scmp.ne.s32.totalorder %s52, %s54
    %p61 = scmp.eq.s32.totalorder %s23, 1
    %p62 = por %p60, %p61
    %p63 = scmp.ne.s32.totalorder %s54, %s55
    %p64 = scmp.eq.s32.totalorder %s23, 0
    %p65 = por %p63, %p64
    %p66 = scmp.ne.s32.totalorder %s54, %s55
    %p67 = scmp.eq.s32.totalorder %s24, 1
    %p68 = por %p66, %p67
    %p70 = scmp.ne.s32.totalorder %s55, %s69
    %p71 = scmp.eq.s32.totalorder %s24, 0
    %p72 = por %p70, %p71
    %s74 = sadd.s32 %s73, 1
    %p77 = scmp.eq.s32.totalorder %s18, 1
    %p78 = scmp.ne.s32.totalorder %s73, %s75
    %p79 = scmp.eq.s32.totalorder %s18, 0
    %p80 = por %p78, %p79
    %p81 = scmp.ne.s32.totalorder %s73, %s75
    %p82 = scmp.eq.s32.totalorder %s23, 1
    %p83 = por %p81, %p82
    %p84 = scmp.ne.s32.totalorder %s75, %s76
    %p85 = scmp.eq.s32.totalorder %s23, 0
    %p86 = por %p84, %p85
    %p87 = scmp.ne.s32.totalorder %s75, %s76
    %p88 = scmp.eq.s32.totalorder %s24, 1
    %p89 = por %p87, %p88
    %p91 = scmp.ne.s32.totalorder %s76, %s90
    %p92 = scmp.eq.s32.totalorder %s24, 0
    %p93 = por %p91, %p92
    %s95 = sadd.s32 %s94, 1
    %p98 = scmp.eq.s32.totalorder %s18, 1
    %p99 = scmp.ne.s32.totalorder %s94, %s96
    %p100 = scmp.eq.s32.totalorder %s18, 0
    %p101 = por %p99, %p100
    %p102 = scmp.ne.s32.totalorder %s94, %s96
    %p103 = scmp.eq.s32.totalorder %s23, 1
    %p104 = por %p102, %p103
    %p105 = scmp.ne.s32.totalorder %s96, %s97
    %p106 = scmp.eq.s32.totalorder %s23, 0
    %p107 = por %p105, %p106
    %p108 = scmp.ne.s32.totalorder %s96, %s97
    %p109 = scmp.eq.s32.totalorder %s24, 1
    %p110 = por %p108, %p109
    %p112 = scmp.ne.s32.totalorder %s97, %s111
    %p113 = scmp.eq.s32.totalorder %s24, 0
    %p114 = por %p112, %p113
    %s116 = sadd.s32 %s115, 1
    %p119 = scmp.eq.s32.totalorder %s18, 1
    %p120 = scmp.ne.s32.totalorder %s115, %s117
    %p121 = scmp.eq.s32.totalorder %s18, 0
    %p122 = por %p120, %p121
    %p123 = scmp.ne.s32.totalorder %s115, %s117
    %p124 = scmp.eq.s32.totalorder %s23, 1
    %p125 = por %p123, %p124
    %p126 = scmp.ne.s32.totalorder %s117, %s118
    %p127 = scmp.eq.s32.totalorder %s23, 0
    %p128 = por %p126, %p127
    %p129 = scmp.ne.s32.totalorder %s117, %s118
    %p130 = scmp.eq.s32.totalorder %s24, 1
    %p131 = por %p129, %p130
    %p133 = scmp.ne.s32.totalorder %s118, %s132
    %p134 = scmp.eq.s32.totalorder %s24, 0
    %p135 = por %p133, %p134
    %s137 = sadd.s32 %s136, 1
    %p140 = scmp.eq.s32.totalorder %s18, 1
    %p141 = scmp.ne.s32.totalorder %s136, %s138
    %p142 = scmp.eq.s32.totalorder %s18, 0
    %p143 = por %p141, %p142
    %p144 = scmp.ne.s32.totalorder %s136, %s138
    %p145 = scmp.eq.s32.totalorder %s23, 1
    %p146 = por %p144, %p145
    %p147 = scmp.ne.s32.totalorder %s138, %s139
    %p148 = scmp.eq.s32.totalorder %s23, 0
    %p149 = por %p147, %p148
    %p150 = scmp.ne.s32.totalorder %s138, %s139
    %p151 = scmp.eq.s32.totalorder %s24, 1
    %p152 = por %p150, %p151
    %p154 = scmp.ne.s32.totalorder %s139, %s153
    %p155 = scmp.eq.s32.totalorder %s24, 0
    %p156 = por %p154, %p155
    %s158 = sadd.s32 %s157, 1
    %p161 = scmp.eq.s32.totalorder %s18, 1
    %p162 = scmp.ne.s32.totalorder %s157, %s159
    %p163 = scmp.eq.s32.totalorder %s18, 0
    %p164 = por %p162, %p163
    %p165 = scmp.ne.s32.totalorder %s157, %s159
    %p166 = scmp.eq.s32.totalorder %s23, 1
    %p167 = por %p165, %p166
    %p168 = scmp.ne.s32.totalorder %s159, %s160
    %p169 = scmp.eq.s32.totalorder %s23, 0
    %p170 = por %p168, %p169
    %p171 = scmp.ne.s32.totalorder %s159, %s160
    %p172 = scmp.eq.s32.totalorder %s24, 1
    %p173 = por %p171, %p172
    %p175 = scmp.ne.s32.totalorder %s160, %s174
    %p176 = scmp.eq.s32.totalorder %s24, 0
    %p177 = por %p175, %p176
    %s179 = sadd.s32 %s178, 1
    %p182 = scmp.eq.s32.totalorder %s18, 1
    %p183 = scmp.ne.s32.totalorder %s178, %s180
    %p184 = scmp.eq.s32.totalorder %s18, 0
    %p185 = por %p183, %p184
    %p186 = scmp.ne.s32.totalorder %s178, %s180
    %p187 = scmp.eq.s32.totalorder %s23, 1
    %p188 = por %p186, %p187
    %p189 = scmp.ne.s32.totalorder %s180, %s181
    %p190 = scmp.eq.s32.totalorder %s23, 0
    %p191 = por %p189, %p190
    %p192 = scmp.ne.s32.totalorder %s180, %s181
    %p193 = scmp.eq.s32.totalorder %s24, 1
    %p194 = por %p192, %p193
    %p196 = scmp.ne.s32.totalorder %s181, %s195
    %p197 = scmp.eq.s32.totalorder %s24, 0
    %p198 = por %p196, %p197
    %s200 = sadd.s32 %s199, 1
    %p203 = scmp.eq.s32.totalorder %s18, 1
    %p204 = scmp.ne.s32.totalorder %s199, %s201
    %p205 = scmp.eq.s32.totalorder %s18, 0
    %p206 = por %p204, %p205
    %p207 = scmp.ne.s32.totalorder %s199, %s201
    %p208 = scmp.eq.s32.totalorder %s23, 1
    %p209 = por %p207, %p208
    %p210 = scmp.ne.s32.totalorder %s201, %s202
    %p211 = scmp.eq.s32.totalorder %s23, 0
    %p212 = por %p210, %p211
    %p213 = scmp.ne.s32.totalorder %s201, %s202
    %p214 = scmp.eq.s32.totalorder %s24, 1
    %p215 = por %p213, %p214
    %p217 = scmp.ne.s32.totalorder %s202, %s216
    %p218 = scmp.eq.s32.totalorder %s24, 0
    %p219 = por %p217, %p218
    %s221 = sadd.s32 %s220, 1
    %p224 = scmp.eq.s32.totalorder %s18, 1
    %p225 = scmp.ne.s32.totalorder %s220, %s222
    %p226 = scmp.eq.s32.totalorder %s18, 0
    %p227 = por %p225, %p226
    %p228 = scmp.ne.s32.totalorder %s220, %s222
    %p229 = scmp.eq.s32.totalorder %s23, 1
    %p230 = por %p228, %p229
    %p231 = scmp.ne.s32.totalorder %s222, %s223
    %p232 = scmp.eq.s32.totalorder %s23, 0
    %p233 = por %p231, %p232
    %p234 = scmp.ne.s32.totalorder %s222, %s223
    %p235 = scmp.eq.s32.totalorder %s24, 1
    %p236 = por %p234, %p235
    %p238 = scmp.ne.s32.totalorder %s223, %s237
    %p239 = scmp.eq.s32.totalorder %s24, 0
    %p240 = por %p238, %p239
    %s241 = ssub.s32 %s18, %s25
    %p242 = scmp.eq.s32.totalorder %s241, 0
    %s244 = sadd.s32 %s243, 1
    %s245 = scalar_select %p242, %s243, %s244
    %p248 = pneg %p242
    %p249 = scmp.eq.s32.totalorder %s18, 1
    %p250 = por %p248, %p249
    %p251 = scmp.ne.s32.totalorder %s243, %s246
    %p252 = scmp.eq.s32.totalorder %s18, 0
    %p253 = por %p251, %p252
    %p254 = scmp.ne.s32.totalorder %s243, %s246
    %p255 = scmp.eq.s32.totalorder %s23, 1
    %p256 = por %p254, %p255
    %p257 = scmp.ne.s32.totalorder %s246, %s247
    %p258 = scmp.eq.s32.totalorder %s23, 0
    %p259 = por %p257, %p258
    %p260 = scmp.ne.s32.totalorder %s246, %s247
    %p261 = scmp.eq.s32.totalorder %s24, 1
    %p262 = por %p260, %p261
    %p264 = scmp.ne.s32.totalorder %s247, %s263
    %p265 = scmp.eq.s32.totalorder %s24, 0
    %p266 = por %p264, %p265
    %s267 = ssub.s32 %s18, %s25
    %p268 = scmp.eq.s32.totalorder %s267, 0
    %s270 = sadd.s32 %s269, 1
    %s271 = scalar_select %p268, %s269, %s270
    %p274 = pneg %p268
    %p275 = scmp.eq.s32.totalorder %s18, 1
    %p276 = por %p274, %p275
    %p277 = scmp.ne.s32.totalorder %s269, %s272
    %p278 = scmp.eq.s32.totalorder %s18, 0
    %p279 = por %p277, %p278
    %p280 = scmp.ne.s32.totalorder %s269, %s272
    %p281 = scmp.eq.s32.totalorder %s23, 1
    %p282 = por %p280, %p281
    %p283 = scmp.ne.s32.totalorder %s272, %s273
    %p284 = scmp.eq.s32.totalorder %s23, 0
    %p285 = por %p283, %p284
    %p286 = scmp.ne.s32.totalorder %s272, %s273
    %p287 = scmp.eq.s32.totalorder %s24, 1
    %p288 = por %p286, %p287
    %p290 = scmp.ne.s32.totalorder %s273, %s289
    %p291 = scmp.eq.s32.totalorder %s24, 0
    %p292 = por %p290, %p291
    %p293 = scmp.le.s32.totalorder 1, %s18
    %p294 = scmp.lt.s32.totalorder %s18, 3
    %p295 = pnand %p293, %p294
    %p296 = pneg %p295
    // Predicated region
    $region9: #{joint_flow_inst.1} parent=5 // pred_check
      _
    $region10: #{joint_flow_inst.1} parent=5 // pred_check_branch
      %298 = sbr.rel (%p295) target = $region12
    $region11: #{joint_flow_inst.1} parent=5 // pred_region
      %s299 = ssub.s32 %s18, 1
      // Predicated region
      $region13: #{joint_flow_inst.1} parent=11 // pred_check
        %p300 = pneg %p65
      $region14: #{joint_flow_inst.1} parent=11 // pred_check_branch
        %302 = sbr.rel (%p300) target = $region16
      $region15: #{joint_flow_inst.1} parent=11 // pred_region
        _
      $region16: #{joint_flow_inst.1} parent=11 // pred_fallthru
        _
      // Predicated region
      $region17: #{joint_flow_inst.1} parent=11 // pred_check
        %p303 = pneg %p86
      $region18: #{joint_flow_inst.1} parent=11 // pred_check_branch
        %305 = sbr.rel (%p303) target = $region20
      $region19: #{joint_flow_inst.1} parent=11 // pred_region
        _
      $region20: #{joint_flow_inst.1} parent=11 // pred_fallthru
        _
      // Predicated region
      $region21: #{joint_flow_inst.1} parent=11 // pred_check
        %p306 = pneg %p107
      $region22: #{joint_flow_inst.1} parent=11 // pred_check_branch
        %308 = sbr.rel (%p306) target = $region24
      $region23: #{joint_flow_inst.1} parent=11 // pred_region
        _
      $region24: #{joint_flow_inst.1} parent=11 // pred_fallthru
        _
      // Predicated region
      $region25: #{joint_flow_inst.1} parent=11 // pred_check
        %p309 = pneg %p128
      $region26: #{joint_flow_inst.1} parent=11 // pred_check_branch
        %311 = sbr.rel (%p309) target = $region28
      $region27: #{joint_flow_inst.1} parent=11 // pred_region
        _
      $region28: #{joint_flow_inst.1} parent=11 // pred_fallthru
        _
      // Predicated region
      $region29: #{joint_flow_inst.1} parent=11 // pred_check
        %p312 = pneg %p149
      $region30: #{joint_flow_inst.1} parent=11 // pred_check_branch
        %314 = sbr.rel (%p312) target = $region32
      $region31: #{joint_flow_inst.1} parent=11 // pred_region
        _
      $region32: #{joint_flow_inst.1} parent=11 // pred_fallthru
        _
      // Predicated region
      $region33: #{joint_flow_inst.1} parent=11 // pred_check
        %p315 = pneg %p170
      $region34: #{joint_flow_inst.1} parent=11 // pred_check_branch
        %317 = sbr.rel (%p315) target = $region36
      $region35: #{joint_flow_inst.1} parent=11 // pred_region
        _
      $region36: #{joint_flow_inst.1} parent=11 // pred_fallthru
        _
      // Predicated region
      $region37: #{joint_flow_inst.1} parent=11 // pred_check
        %p318 = pneg %p191
      $region38: #{joint_flow_inst.1} parent=11 // pred_check_branch
        %320 = sbr.rel (%p318) target = $region40
      $region39: #{joint_flow_inst.1} parent=11 // pred_region
        _
      $region40: #{joint_flow_inst.1} parent=11 // pred_fallthru
        _
      // Predicated region
      $region41: #{joint_flow_inst.1} parent=11 // pred_check
        %p321 = pneg %p212
      $region42: #{joint_flow_inst.1} parent=11 // pred_check_branch
        %323 = sbr.rel (%p321) target = $region44
      $region43: #{joint_flow_inst.1} parent=11 // pred_region
        _
      $region44: #{joint_flow_inst.1} parent=11 // pred_fallthru
        _
      // Predicated region
      $region45: #{joint_flow_inst.1} parent=11 // pred_check
        %p324 = pneg %p233
      $region46: #{joint_flow_inst.1} parent=11 // pred_check_branch
        %326 = sbr.rel (%p324) target = $region48
      $region47: #{joint_flow_inst.1} parent=11 // pred_region
        _
      $region48: #{joint_flow_inst.1} parent=11 // pred_fallthru
        _
    $region12: #{joint_flow_inst.1} parent=5 // pred_fallthru
      _
    %p327 = scmp.lt.s32.totalorder %s18, 2
    // Predicated region
    $region49: #{joint_flow_inst.1} parent=5 // pred_check
      %p328 = pneg %p327
    $region50: #{joint_flow_inst.1} parent=5 // pred_check_branch
      %330 = sbr.rel (%p328) target = $region52
    $region51: #{joint_flow_inst.1} parent=5 // pred_region
      // Predicated region
      $region53: #{joint_flow_inst.1} parent=51 // pred_check
        %p331 = pneg %p38
      $region54: #{joint_flow_inst.1} parent=51 // pred_check_branch
        %333 = sbr.rel (%p331) target = $region56
      $region55: #{joint_flow_inst.1} parent=51 // pred_region
        %s334 = smul.u32 16, %s18
        %p335 = scmp.lt.s32.totalorder %s334, 31
        %s336 = scalar_select %p335, %s334, 31
        %s337 = smul.addr %s336, 4
        %s338 = scalar_lea.vmem %s0, %s337
        %s339 = smul.u32 16, %s18
      $region56: #{joint_flow_inst.1} parent=51 // pred_fallthru
        _
    $region52: #{joint_flow_inst.1} parent=5 // pred_fallthru
      _
    %p340 = scmp.le.s32.totalorder 1, %s18
    %p341 = scmp.lt.s32.totalorder %s18, 3
    %p342 = pnand %p340, %p341
    %p343 = pneg %p342
    // Predicated region
    $region57: #{joint_flow_inst.1} parent=5 // pred_check
      _
    $region58: #{joint_flow_inst.1} parent=5 // pred_check_branch
      %345 = sbr.rel (%p342) target = $region60
    $region59: #{joint_flow_inst.1} parent=5 // pred_region
      %s346 = ssub.s32 %s18, 1
      %s347 = smul.u32 16, %s23
      %p348 = scmp.lt.s32.totalorder %s347, 31
      %s349 = scalar_select %p348, %s347, 31
      %s350 = smul.addr %s349, 4
      %s351 = scalar_lea.vmem %s0, %s350
      %p352 = pneg %p44
      %p353 = pneg %p41
      %p354 = pneg %p65
      %p355 = pneg %p62
      %p356 = pneg %p86
      %p357 = pneg %p83
      %p358 = pneg %p107
      %p359 = pneg %p104
      %p360 = pneg %p128
      %p361 = pneg %p125
      %p362 = pneg %p149
      %p363 = pneg %p146
      %p364 = pneg %p170
      %p365 = pneg %p167
      %p366 = pneg %p191
      %p367 = pneg %p188
      %p368 = pneg %p212
      %p369 = pneg %p209
      %p370 = pneg %p233
      %p371 = pneg %p230
      %p372 = pneg %p259
      %p373 = pneg %p256
      %s374 = smul.u32 16, %s23
      %p375 = scmp.lt.s32.totalorder %s374, 31
      %s376 = scalar_select %p375, %s374, 31
      %s377 = smul.addr %s376, 8
      %s378 = scalar_lea.vmem %s10, %s377
      %p379 = pneg %p285
      %p380 = pneg %p282
      %s381 = smul.u32 16, %s23
      %p382 = scmp.lt.s32.totalorder %s381, 31
      %s383 = scalar_select %p382, %s381, 31
      %s384 = smul.addr %s383, 8
      %s385 = scalar_lea.vmem %s11, %s384
      %s386 = smul.u32 16, %s23
      %p387 = scmp.lt.s32.totalorder %s386, 31
      %s388 = scalar_select %p387, %s386, 31
      %s389 = smul.addr %s388, 4
      %s390 = scalar_lea.vmem %s0, %s389
      %s391 = smul.u32 16, %s23
      %s392 = smul.u32 16, %s23
      %p393 = scmp.lt.s32.totalorder %s392, 31
      %s394 = scalar_select %p393, %s392, 31
      %s395 = smul.addr %s394, 8
      %s396 = scalar_lea.vmem %s10, %s395
      %s397 = smul.u32 16, %s23
      %s398 = smul.u32 16, %s23
      %p399 = scmp.lt.s32.totalorder %s398, 31
      %s400 = scalar_select %p399, %s398, 31
      %s401 = smul.addr %s400, 8
      %s402 = scalar_lea.vmem %s11, %s401
      %s403 = smul.u32 16, %s23
      %v405 = vld [vmem:[%s390] sm:$0xf]
      %v406 = vld [vmem:[%s390 + $0x4] sm:$0xf]
      %v407 = vld [vmem:[%s390 + $0x8] sm:$0xf]
      %v408 = vld [vmem:[%s390 + $0xc] sm:$0xf]
      %v409 = vld [vmem:[%s390 + $0x10] sm:$0xf]
      %v410 = vld [vmem:[%s390 + $0x14] sm:$0xf]
      %v411 = vld [vmem:[%s390 + $0x18] sm:$0xf]
      %v412 = vld [vmem:[%s390 + $0x1c] sm:$0xf]
      %v413 = vld [vmem:[%s390 + $0x20] sm:$0xf]
      %v414 = vld [vmem:[%s390 + $0x24] sm:$0xf]
      %v415 = vld [vmem:[%s390 + $0x28] sm:$0xf]
      %v416 = vld [vmem:[%s390 + $0x2c] sm:$0xf]
      %v417 = vld [vmem:[%s390 + $0x30] sm:$0xf]
      %v418 = vld [vmem:[%s390 + $0x34] sm:$0xf]
      %v419 = vld [vmem:[%s390 + $0x38] sm:$0xf]
      %v420 = vld [vmem:[%s390 + $0x3c] sm:$0xf]
      %v421 = vld [vmem:[%s1] sm:$0xf]
      %v438 = vunpack.c.l.b16 %v405
      %v439 = vunpack.c.l.b16 %v406
      %v440 = vunpack.c.l.b16 %v407
      %v441 = vunpack.c.l.b16 %v408
      %v442 = vunpack.c.l.b16 %v409
      %v443 = vunpack.c.l.b16 %v410
      %v444 = vunpack.c.l.b16 %v411
      %v445 = vunpack.c.l.b16 %v412
      %v446 = vunpack.c.l.b16 %v413
      %v447 = vunpack.c.l.b16 %v414
      %v448 = vunpack.c.l.b16 %v415
      %v449 = vunpack.c.l.b16 %v416
      %v450 = vunpack.c.l.b16 %v417
      %v451 = vunpack.c.l.b16 %v418
      %v452 = vunpack.c.l.b16 %v419
      %v453 = vunpack.c.l.b16 %v420
      %v454 = vpack.c.b16 %v439, %v438
      %v455 = vpack.c.b16 %v441, %v440
      %v456 = vpack.c.b16 %v443, %v442
      %v457 = vpack.c.b16 %v445, %v444
      %v458 = vpack.c.b16 %v447, %v446
      %v459 = vpack.c.b16 %v449, %v448
      %v460 = vpack.c.b16 %v451, %v450
      %v461 = vpack.c.b16 %v453, %v452
      %v464 = vunpack.c.l.s4 1983009808
      %v465 = vunpack.c.0.s8 %v464
      %v466 = vlaneseq
      %v467 = vshrl.u32 %v466, 7
      %v468 = vsub.s32 %v465, %v467
      %v469 = vrot.slane %v421, %v468
      %v470 = vcombine.high %v469, %v469
      %vm471 = vcmask 23552
      %v473 = vsel %vm471, %v454, 0
      %v476 = vsel %vm471, %v455, 0
      %v479 = vsel %vm471, %v456, 0
      %v482 = vsel %vm471, %v457, 0
      %v485 = vsel %vm471, %v458, 0
      %v488 = vsel %vm471, %v459, 0
      %v491 = vsel %vm471, %v460, 0
      %v494 = vsel %vm471, %v461, 0
      %vm496 = vcmask 1040384
      %vm497 = vcmask 1041408
      %v498 = vsel %vm496, 4294967295, 65535
      %v499 = vsel %vm497, %v498, 0
      %v501 = vand.u32 %v469, %v499
      %v504 = vand.u32 %v470, %v499
      %506 = vmatprep.subr.bf16.mxu0 %v504
      %507 = vmatpush1.bf16.msra.mxu0 %v501
      %508 = vmatprep.subr.bf16.mxu0 0
      %509 = vmatpush1.bf16.msra.mxu0 0
      %510 = vmatprep.subr.bf16.mxu0 0
      %511 = vmatpush1.bf16.msra.mxu0 0
      %512 = vmatprep.subr.bf16.mxu0 0
      %513 = vmatpush1.bf16.msra.mxu0 0
      %514 = vmatprep.subr.bf16.mxu0 0
      %515 = vmatpush1.bf16.msra.mxu0 0
      %516 = vmatprep.subr.bf16.mxu0 0
      %517 = vmatpush1.bf16.msra.mxu0 0
      %518 = vmatprep.subr.bf16.mxu0 0
      %519 = vmatpush1.bf16.msra.mxu0 0
      %520 = vmatprep.subr.bf16.mxu0 0
      %521 = vmatpush1.bf16.msra.mxu0 0
      %522 = vmatprep.subr.bf16.mxu0 0
      %523 = vmatpush1.bf16.msra.mxu0 0
      %524 = vmatprep.subr.bf16.mxu0 0
      %525 = vmatpush1.bf16.msra.mxu0 0
      %526 = vmatprep.subr.bf16.mxu0 0
      %527 = vmatpush1.bf16.msra.mxu0 0
      %528 = vmatprep.subr.bf16.mxu0 0
      %529 = vmatpush1.bf16.msra.mxu0 0
      %530 = vmatprep.subr.bf16.mxu0 0
      %531 = vmatpush1.bf16.msra.mxu0 0
      %532 = vmatprep.subr.bf16.mxu0 0
      %533 = vmatpush1.bf16.msra.mxu0 0
      %534 = vmatprep.subr.bf16.mxu0 0
      %535 = vmatpush1.bf16.msra.mxu0 0
      %536 = vmatprep.subr.bf16.mxu0 0
      %537 = vmatpush1.bf16.msra.mxu0 0
      %538 = vmatprep.mubr.bf16.mxu0 0
      %539 = vmatmul.mubr.bf16.gmra.mrb[0].mxu0 %v473
      %v540 = vpop.f32.mrb[0].mxu0
      %v541 = vadd.f32 0.0, %v540
      %v542 = vpop.f32.mrb[0].mxu0
      %v543 = vadd.f32 0.0, %v542
      %v544 = vpop.f32.mrb[0].mxu0
      %v545 = vadd.f32 0.0, %v544
      %v546 = vpop.f32.mrb[0].mxu0
      %v547 = vadd.f32 0.0, %v546
      %548 = vmatprep.mubr.bf16.mxu0 0
      %549 = vmatmul.mubr.bf16.gmra.mrb[0].mxu0 %v476
      %v550 = vpop.f32.mrb[0].mxu0
      %v551 = vadd.f32 0.0, %v550
      %v552 = vpop.f32.mrb[0].mxu0
      %v553 = vadd.f32 0.0, %v552
      %v554 = vpop.f32.mrb[0].mxu0
      %v555 = vadd.f32 0.0, %v554
      %v556 = vpop.f32.mrb[0].mxu0
      %v557 = vadd.f32 0.0, %v556
      %558 = vmatprep.mubr.bf16.mxu0 0
      %559 = vmatmul.mubr.bf16.gmra.mrb[0].mxu0 %v479
      %v560 = vpop.f32.mrb[0].mxu0
      %v561 = vadd.f32 0.0, %v560
      %v562 = vpop.f32.mrb[0].mxu0
      %v563 = vadd.f32 0.0, %v562
      %v564 = vpop.f32.mrb[0].mxu0
      %v565 = vadd.f32 0.0, %v564
      %v566 = vpop.f32.mrb[0].mxu0
      %v567 = vadd.f32 0.0, %v566
      %568 = vmatprep.mubr.bf16.mxu0 0
      %569 = vmatmul.mubr.bf16.gmra.mrb[0].mxu0 %v482
      %v570 = vpop.f32.mrb[0].mxu0
      %v571 = vadd.f32 0.0, %v570
      %v572 = vpop.f32.mrb[0].mxu0
      %v573 = vadd.f32 0.0, %v572
      %v574 = vpop.f32.mrb[0].mxu0
      %v575 = vadd.f32 0.0, %v574
      %v576 = vpop.f32.mrb[0].mxu0
      %v577 = vadd.f32 0.0, %v576
      %578 = vmatprep.mubr.bf16.mxu0 0
      %579 = vmatmul.mubr.bf16.gmra.mrb[0].mxu0 %v485
      %v580 = vpop.f32.mrb[0].mxu0
      %v581 = vadd.f32 0.0, %v580
      %v582 = vpop.f32.mrb[0].mxu0
      %v583 = vadd.f32 0.0, %v582
      %v584 = vpop.f32.mrb[0].mxu0
      %v585 = vadd.f32 0.0, %v584
      %v586 = vpop.f32.mrb[0].mxu0
      %v587 = vadd.f32 0.0, %v586
      %588 = vmatprep.mubr.bf16.mxu0 0
      %589 = vmatmul.mubr.bf16.gmra.mrb[0].mxu0 %v488
      %v590 = vpop.f32.mrb[0].mxu0
      %v591 = vadd.f32 0.0, %v590
      %v592 = vpop.f32.mrb[0].mxu0
      %v593 = vadd.f32 0.0, %v592
      %v594 = vpop.f32.mrb[0].mxu0
      %v595 = vadd.f32 0.0, %v594
      %v596 = vpop.f32.mrb[0].mxu0
      %v597 = vadd.f32 0.0, %v596
      %598 = vmatprep.mubr.bf16.mxu0 0
      %599 = vmatmul.mubr.bf16.gmra.mrb[0].mxu0 %v491
      %v600 = vpop.f32.mrb[0].mxu0
      %v601 = vadd.f32 0.0, %v600
      %v602 = vpop.f32.mrb[0].mxu0
      %v603 = vadd.f32 0.0, %v602
      %v604 = vpop.f32.mrb[0].mxu0
      %v605 = vadd.f32 0.0, %v604
      %v606 = vpop.f32.mrb[0].mxu0
      %v607 = vadd.f32 0.0, %v606
      %608 = vmatprep.mubr.bf16.mxu0 0
      %609 = vmatmul.mubr.bf16.gmra.mrb[0].mxu0 %v494
      %v610 = vpop.f32.mrb[0].mxu0
      %v611 = vadd.f32 0.0, %v610
      %v612 = vpop.f32.mrb[0].mxu0
      %v613 = vadd.f32 0.0, %v612
      %v614 = vpop.f32.mrb[0].mxu0
      %v615 = vadd.f32 0.0, %v614
      %v616 = vpop.f32.mrb[0].mxu0
      %v617 = vadd.f32 0.0, %v616
      %618 = vdwg.mxu0
      %v619 = vld [vmem:[%s3] sm:$0x1]
      %v621 = vlaneseq
      %v622 = vshrl.u32 %v621, 7
      %v623 = vsub.s32 0, %v622
      %v624 = vrot.slane %v619, %v623
      %v626 = vadd.f32 %v543, %v624
      %v627 = vadd.f32 %v547, %v624
      %v628 = vadd.f32 %v553, %v624
      %v629 = vadd.f32 %v557, %v624
      %v630 = vadd.f32 %v563, %v624
      %v631 = vadd.f32 %v567, %v624
      %v632 = vadd.f32 %v573, %v624
      %v633 = vadd.f32 %v577, %v624
      %v634 = vadd.f32 %v583, %v624
      %v635 = vadd.f32 %v587, %v624
      %v636 = vadd.f32 %v593, %v624
      %v637 = vadd.f32 %v597, %v624
      %v638 = vadd.f32 %v603, %v624
      %v639 = vadd.f32 %v607, %v624
      %v640 = vadd.f32 %v613, %v624
      %v641 = vadd.f32 %v617, %v624
      %v642 = vmax.f32 %v626, 0.0
      %v643 = vmax.f32 %v627, 0.0
      %v644 = vmax.f32 %v628, 0.0
      %v645 = vmax.f32 %v629, 0.0
      %v646 = vmax.f32 %v630, 0.0
      %v647 = vmax.f32 %v631, 0.0
      %v648 = vmax.f32 %v632, 0.0
      %v649 = vmax.f32 %v633, 0.0
      %v650 = vmax.f32 %v634, 0.0
      %v651 = vmax.f32 %v635, 0.0
      %v652 = vmax.f32 %v636, 0.0
      %v653 = vmax.f32 %v637, 0.0
      %v654 = vmax.f32 %v638, 0.0
      %v655 = vmax.f32 %v639, 0.0
      %v656 = vmax.f32 %v640, 0.0
      %v657 = vmax.f32 %v641, 0.0
      %v658 = vpack.c.bf16 %v643, %v642
      %v659 = vpack.c.bf16 %v645, %v644
      %v660 = vpack.c.bf16 %v647, %v646
      %v661 = vpack.c.bf16 %v649, %v648
      %v662 = vpack.c.bf16 %v651, %v650
      %v663 = vpack.c.bf16 %v653, %v652
      %v664 = vpack.c.bf16 %v655, %v654
      %v665 = vpack.c.bf16 %v657, %v656
      %v666 = vld [vmem:[%s2] sm:$0xff]
      %v667 = vld [vmem:[%s2 + $0x8] sm:$0xff]
      %v668 = vld [vmem:[%s2 + $0x10] sm:$0xff]
      %v669 = vld [vmem:[%s2 + $0x18] sm:$0xff]
      %v670 = vld [vmem:[%s2 + $0x20] sm:$0xff]
      %v671 = vld [vmem:[%s2 + $0x28] sm:$0xff]
      %v672 = vld [vmem:[%s2 + $0x30] sm:$0xff]
      %v673 = vld [vmem:[%s2 + $0x38] sm:$0xff]
      %v682 = vunpack.c.l.b16 %v666
      %v683 = vunpack.c.h.b16 %v666
      %v684 = vunpack.c.l.b16 %v667
      %v685 = vunpack.c.h.b16 %v667
      %v686 = vunpack.c.l.b16 %v668
      %v687 = vunpack.c.h.b16 %v668
      %v688 = vunpack.c.l.b16 %v669
      %v689 = vunpack.c.h.b16 %v669
      %v690 = vunpack.c.l.b16 %v670
      %v691 = vunpack.c.h.b16 %v670
      %v692 = vunpack.c.l.b16 %v671
      %v693 = vunpack.c.h.b16 %v671
      %v694 = vunpack.c.l.b16 %v672
      %v695 = vunpack.c.h.b16 %v672
      %v696 = vunpack.c.l.b16 %v673
      %v697 = vunpack.c.h.b16 %v673
      %v698 = vpack.c.b16 %v684, %v682
      %v699 = vpack.c.b16 %v685, %v683
      %v700 = vpack.c.b16 %v688, %v686
      %v701 = vpack.c.b16 %v689, %v687
      %v702 = vpack.c.b16 %v692, %v690
      %v703 = vpack.c.b16 %v693, %v691
      %v704 = vpack.c.b16 %v696, %v694
      %v705 = vpack.c.b16 %v697, %v695
      %vm714 = vcmask 523264
      %v716 = vsel %vm714, %v658, 0
      %v719 = vsel %vm714, %v659, 0
      %v722 = vsel %vm714, %v660, 0
      %v725 = vsel %vm714, %v661, 0
      %v728 = vsel %vm714, %v662, 0
      %v731 = vsel %vm714, %v663, 0
      %v734 = vsel %vm714, %v664, 0
      %v737 = vsel %vm714, %v665, 0
      %739 = vmatprep.subr.bf16.mxu0 %v699
      %740 = vmatpush1.bf16.msra.mxu0 %v698
      %741 = vmatprep.subr.bf16.mxu0 %v701
      %742 = vmatpush1.bf16.msra.mxu0 %v700
      %743 = vmatprep.subr.bf16.mxu0 %v703
      %744 = vmatpush1.bf16.msra.mxu0 %v702
      %745 = vmatprep.subr.bf16.mxu0 %v705
      %746 = vmatpush1.bf16.msra.mxu0 %v704
      %747 = vmatprep.subr.bf16.mxu0 0
      %748 = vmatpush1.bf16.msra.mxu0 0
      %749 = vmatprep.subr.bf16.mxu0 0
      %750 = vmatpush1.bf16.msra.mxu0 0
      %751 = vmatprep.subr.bf16.mxu0 0
      %752 = vmatpush1.bf16.msra.mxu0 0
      %753 = vmatprep.subr.bf16.mxu0 0
      %754 = vmatpush1.bf16.msra.mxu0 0
      %755 = vmatprep.subr.bf16.mxu0 0
      %756 = vmatpush1.bf16.msra.mxu0 0
      %757 = vmatprep.subr.bf16.mxu0 0
      %758 = vmatpush1.bf16.msra.mxu0 0
      %759 = vmatprep.subr.bf16.mxu0 0
      %760 = vmatpush1.bf16.msra.mxu0 0
      %761 = vmatprep.subr.bf16.mxu0 0
      %762 = vmatpush1.bf16.msra.mxu0 0
      %763 = vmatprep.subr.bf16.mxu0 0
      %764 = vmatpush1.bf16.msra.mxu0 0
      %765 = vmatprep.subr.bf16.mxu0 0
      %766 = vmatpush1.bf16.msra.mxu0 0
      %767 = vmatprep.subr.bf16.mxu0 0
      %768 = vmatpush1.bf16.msra.mxu0 0
      %769 = vmatprep.subr.bf16.mxu0 0
      %770 = vmatpush1.bf16.msra.mxu0 0
      %771 = vmatprep.mubr.bf16.mxu0 0
      %772 = vmatmul.mubr.bf16.gmra.mrb[0].mxu0 %v716
      %v773 = vpop.f32.mrb[0].mxu0
      %v774 = vadd.f32 0.0, %v773
      %v775 = vpop.f32.mrb[0].mxu0
      %v776 = vadd.f32 0.0, %v775
      %v777 = vpop.f32.mrb[0].mxu0
      %v778 = vadd.f32 0.0, %v777
      %v779 = vpop.f32.mrb[0].mxu0
      %v780 = vadd.f32 0.0, %v779
      %781 = vmatprep.mubr.bf16.mxu0 0
      %782 = vmatmul.mubr.bf16.gmra.mrb[0].mxu0 %v719
      %v783 = vpop.f32.mrb[0].mxu0
      %v784 = vadd.f32 0.0, %v783
      %v785 = vpop.f32.mrb[0].mxu0
      %v786 = vadd.f32 0.0, %v785
      %v787 = vpop.f32.mrb[0].mxu0
      %v788 = vadd.f32 0.0, %v787
      %v789 = vpop.f32.mrb[0].mxu0
      %v790 = vadd.f32 0.0, %v789
      %791 = vmatprep.mubr.bf16.mxu0 0
      %792 = vmatmul.mubr.bf16.gmra.mrb[0].mxu0 %v722
      %v793 = vpop.f32.mrb[0].mxu0
      %v794 = vadd.f32 0.0, %v793
      %v795 = vpop.f32.mrb[0].mxu0
      %v796 = vadd.f32 0.0, %v795
      %v797 = vpop.f32.mrb[0].mxu0
      %v798 = vadd.f32 0.0, %v797
      %v799 = vpop.f32.mrb[0].mxu0
      %v800 = vadd.f32 0.0, %v799
      %801 = vmatprep.mubr.bf16.mxu0 0
      %802 = vmatmul.mubr.bf16.gmra.mrb[0].mxu0 %v725
      %v803 = vpop.f32.mrb[0].mxu0
      %v804 = vadd.f32 0.0, %v803
      %v805 = vpop.f32.mrb[0].mxu0
      %v806 = vadd.f32 0.0, %v805
      %v807 = vpop.f32.mrb[0].mxu0
      %v808 = vadd.f32 0.0, %v807
      %v809 = vpop.f32.mrb[0].mxu0
      %v810 = vadd.f32 0.0, %v809
      %811 = vmatprep.mubr.bf16.mxu0 0
      %812 = vmatmul.mubr.bf16.gmra.mrb[0].mxu0 %v728
      %v813 = vpop.f32.mrb[0].mxu0
      %v814 = vadd.f32 0.0, %v813
      %v815 = vpop.f32.mrb[0].mxu0
      %v816 = vadd.f32 0.0, %v815
      %v817 = vpop.f32.mrb[0].mxu0
      %v818 = vadd.f32 0.0, %v817
      %v819 = vpop.f32.mrb[0].mxu0
      %v820 = vadd.f32 0.0, %v819
      %821 = vmatprep.mubr.bf16.mxu0 0
      %822 = vmatmul.mubr.bf16.gmra.mrb[0].mxu0 %v731
      %v823 = vpop.f32.mrb[0].mxu0
      %v824 = vadd.f32 0.0, %v823
      %v825 = vpop.f32.mrb[0].mxu0
      %v826 = vadd.f32 0.0, %v825
      %v827 = vpop.f32.mrb[0].mxu0
      %v828 = vadd.f32 0.0, %v827
      %v829 = vpop.f32.mrb[0].mxu0
      %v830 = vadd.f32 0.0, %v829
      %831 = vmatprep.mubr.bf16.mxu0 0
      %832 = vmatmul.mubr.bf16.gmra.mrb[0].mxu0 %v734
      %v833 = vpop.f32.mrb[0].mxu0
      %v834 = vadd.f32 0.0, %v833
      %v835 = vpop.f32.mrb[0].mxu0
      %v836 = vadd.f32 0.0, %v835
      %v837 = vpop.f32.mrb[0].mxu0
      %v838 = vadd.f32 0.0, %v837
      %v839 = vpop.f32.mrb[0].mxu0
      %v840 = vadd.f32 0.0, %v839
      %841 = vmatprep.mubr.bf16.mxu0 0
      %842 = vmatmul.mubr.bf16.gmra.mrb[0].mxu0 %v737
      %v843 = vpop.f32.mrb[0].mxu0
      %v844 = vadd.f32 0.0, %v843
      %v845 = vpop.f32.mrb[0].mxu0
      %v846 = vadd.f32 0.0, %v845
      %v847 = vpop.f32.mrb[0].mxu0
      %v848 = vadd.f32 0.0, %v847
      %v849 = vpop.f32.mrb[0].mxu0
      %v850 = vadd.f32 0.0, %v849
      %851 = vdwg.mxu0
      %v852 = vld [vmem:[%s4] sm:$0x1]
      %v854 = vlaneseq
      %v855 = vshrl.u32 %v854, 7
      %v856 = vsub.s32 0, %v855
      %v857 = vrot.slane %v852, %v856
      %v859 = vadd.f32 %v776, %v857
      %v860 = vadd.f32 %v780, %v857
      %v861 = vadd.f32 %v786, %v857
      %v862 = vadd.f32 %v790, %v857
      %v863 = vadd.f32 %v796, %v857
      %v864 = vadd.f32 %v800, %v857
      %v865 = vadd.f32 %v806, %v857
      %v866 = vadd.f32 %v810, %v857
      %v867 = vadd.f32 %v816, %v857
      %v868 = vadd.f32 %v820, %v857
      %v869 = vadd.f32 %v826, %v857
      %v870 = vadd.f32 %v830, %v857
      %v871 = vadd.f32 %v836, %v857
      %v872 = vadd.f32 %v840, %v857
      %v873 = vadd.f32 %v846, %v857
      %v874 = vadd.f32 %v850, %v857
      %vm875 = vcmask 80896
      %v876 = vsel %vm875, %v859, -inf
      %877 = vmax.xlane.f32.xlu0 %v876
      %v878 = vpop.xlane.xlu0 %877
      %v879 = vsel %vm875, %v860, -inf
      %880 = vmax.xlane.f32.xlu0 %v879
      %v881 = vpop.xlane.xlu0 %880
      %v882 = vsel %vm875, %v861, -inf
      %883 = vmax.xlane.f32.xlu0 %v882
      %v884 = vpop.xlane.xlu0 %883
      %v885 = vsel %vm875, %v862, -inf
      %886 = vmax.xlane.f32.xlu0 %v885
      %v887 = vpop.xlane.xlu0 %886
      %v888 = vsel %vm875, %v863, -inf
      %889 = vmax.xlane.f32.xlu0 %v888
      %v890 = vpop.xlane.xlu0 %889
      %v891 = vsel %vm875, %v864, -inf
      %892 = vmax.xlane.f32.xlu0 %v891
      %v893 = vpop.xlane.xlu0 %892
      %v894 = vsel %vm875, %v865, -inf
      %895 = vmax.xlane.f32.xlu0 %v894
      %v896 = vpop.xlane.xlu0 %895
      %v897 = vsel %vm875, %v866, -inf
      %898 = vmax.xlane.f32.xlu0 %v897
      %v899 = vpop.xlane.xlu0 %898
      %v900 = vsel %vm875, %v867, -inf
      %901 = vmax.xlane.f32.xlu0 %v900
      %v902 = vpop.xlane.xlu0 %901
      %v903 = vsel %vm875, %v868, -inf
      %904 = vmax.xlane.f32.xlu0 %v903
      %v905 = vpop.xlane.xlu0 %904
      %v906 = vsel %vm875, %v869, -inf
      %907 = vmax.xlane.f32.xlu0 %v906
      %v908 = vpop.xlane.xlu0 %907
      %v909 = vsel %vm875, %v870, -inf
      %910 = vmax.xlane.f32.xlu0 %v909
      %v911 = vpop.xlane.xlu0 %910
      %v912 = vsel %vm875, %v871, -inf
      %913 = vmax.xlane.f32.xlu0 %v912
      %v914 = vpop.xlane.xlu0 %913
      %v915 = vsel %vm875, %v872, -inf
      %916 = vmax.xlane.f32.xlu0 %v915
      %v917 = vpop.xlane.xlu0 %916
      %v918 = vsel %vm875, %v873, -inf
      %919 = vmax.xlane.f32.xlu0 %v918
      %v920 = vpop.xlane.xlu0 %919
      %v921 = vsel %vm875, %v874, -inf
      %922 = vmax.xlane.f32.xlu0 %v921
      %v923 = vpop.xlane.xlu0 %922
      %v924 = vsub.f32 %v859, %v878
      %v925 = vsub.f32 %v860, %v881
      %v926 = vsub.f32 %v861, %v884
      %v927 = vsub.f32 %v862, %v887
      %v928 = vsub.f32 %v863, %v890
      %v929 = vsub.f32 %v864, %v893
      %v930 = vsub.f32 %v865, %v896
      %v931 = vsub.f32 %v866, %v899
      %v932 = vsub.f32 %v867, %v902
      %v933 = vsub.f32 %v868, %v905
      %v934 = vsub.f32 %v869, %v908
      %v935 = vsub.f32 %v870, %v911
      %v936 = vsub.f32 %v871, %v914
      %v937 = vsub.f32 %v872, %v917
      %v938 = vsub.f32 %v873, %v920
      %v939 = vsub.f32 %v874, %v923
      %v940 = vmul.f32 %v924, 1.442695
      %v941 = vpow.pop %v940
      %v942 = vmul.f32 %v925, 1.442695
      %v943 = vpow.pop %v942
      %v944 = vmul.f32 %v926, 1.442695
      %v945 = vpow.pop %v944
      %v946 = vmul.f32 %v927, 1.442695
      %v947 = vpow.pop %v946
      %v948 = vmul.f32 %v928, 1.442695
      %v949 = vpow.pop %v948
      %v950 = vmul.f32 %v929, 1.442695
      %v951 = vpow.pop %v950
      %v952 = vmul.f32 %v930, 1.442695
      %v953 = vpow.pop %v952
      %v954 = vmul.f32 %v931, 1.442695
      %v955 = vpow.pop %v954
      %v956 = vmul.f32 %v932, 1.442695
      %v957 = vpow.pop %v956
      %v958 = vmul.f32 %v933, 1.442695
      %v959 = vpow.pop %v958
      %v960 = vmul.f32 %v934, 1.442695
      %v961 = vpow.pop %v960
      %v962 = vmul.f32 %v935, 1.442695
      %v963 = vpow.pop %v962
      %v964 = vmul.f32 %v936, 1.442695
      %v965 = vpow.pop %v964
      %v966 = vmul.f32 %v937, 1.442695
      %v967 = vpow.pop %v966
      %v968 = vmul.f32 %v938, 1.442695
      %v969 = vpow.pop %v968
      %v970 = vmul.f32 %v939, 1.442695
      %v971 = vpow.pop %v970
      %v972 = vsel %vm875, %v941, 0.0
      %973 = vadd.xlane.f32.xlu0 %v972
      %v974 = vpop.xlane.xlu0 %973
      %v975 = vsel %vm875, %v943, 0.0
      %976 = vadd.xlane.f32.xlu0 %v975
      %v977 = vpop.xlane.xlu0 %976
      %v978 = vsel %vm875, %v945, 0.0
      %979 = vadd.xlane.f32.xlu0 %v978
      %v980 = vpop.xlane.xlu0 %979
      %v981 = vsel %vm875, %v947, 0.0
      %982 = vadd.xlane.f32.xlu0 %v981
      %v983 = vpop.xlane.xlu0 %982
      %v984 = vsel %vm875, %v949, 0.0
      %985 = vadd.xlane.f32.xlu0 %v984
      %v986 = vpop.xlane.xlu0 %985
      %v987 = vsel %vm875, %v951, 0.0
      %988 = vadd.xlane.f32.xlu0 %v987
      %v989 = vpop.xlane.xlu0 %988
      %v990 = vsel %vm875, %v953, 0.0
      %991 = vadd.xlane.f32.xlu0 %v990
      %v992 = vpop.xlane.xlu0 %991
      %v993 = vsel %vm875, %v955, 0.0
      %994 = vadd.xlane.f32.xlu0 %v993
      %v995 = vpop.xlane.xlu0 %994
      %v996 = vsel %vm875, %v957, 0.0
      %997 = vadd.xlane.f32.xlu0 %v996
      %v998 = vpop.xlane.xlu0 %997
      %v999 = vsel %vm875, %v959, 0.0
      %1000 = vadd.xlane.f32.xlu0 %v999
      %v1001 = vpop.xlane.xlu0 %1000
      %v1002 = vsel %vm875, %v961, 0.0
      %1003 = vadd.xlane.f32.xlu0 %v1002
      %v1004 = vpop.xlane.xlu0 %1003
      %v1005 = vsel %vm875, %v963, 0.0
      %1006 = vadd.xlane.f32.xlu0 %v1005
      %v1007 = vpop.xlane.xlu0 %1006
      %v1008 = vsel %vm875, %v965, 0.0
      %1009 = vadd.xlane.f32.xlu0 %v1008
      %v1010 = vpop.xlane.xlu0 %1009
      %v1011 = vsel %vm875, %v967, 0.0
      %1012 = vadd.xlane.f32.xlu0 %v1011
      %v1013 = vpop.xlane.xlu0 %1012
      %v1014 = vsel %vm875, %v969, 0.0
      %1015 = vadd.xlane.f32.xlu0 %v1014
      %v1016 = vpop.xlane.xlu0 %1015
      %v1017 = vsel %vm875, %v971, 0.0
      %1018 = vadd.xlane.f32.xlu0 %v1017
      %v1019 = vpop.xlane.xlu0 %1018
      %v1020 = vrcp.pop %v974
      %v1021 = vmul.f32 %v941, %v1020
      %v1022 = vrcp.pop %v977
      %v1023 = vmul.f32 %v943, %v1022
      %v1024 = vrcp.pop %v980
      %v1025 = vmul.f32 %v945, %v1024
      %v1026 = vrcp.pop %v983
      %v1027 = vmul.f32 %v947, %v1026
      %v1028 = vrcp.pop %v986
      %v1029 = vmul.f32 %v949, %v1028
      %v1030 = vrcp.pop %v989
      %v1031 = vmul.f32 %v951, %v1030
      %v1032 = vrcp.pop %v992
      %v1033 = vmul.f32 %v953, %v1032
      %v1034 = vrcp.pop %v995
      %v1035 = vmul.f32 %v955, %v1034
      %v1036 = vrcp.pop %v998
      %v1037 = vmul.f32 %v957, %v1036
      %v1038 = vrcp.pop %v1001
      %v1039 = vmul.f32 %v959, %v1038
      %v1040 = vrcp.pop %v1004
      %v1041 = vmul.f32 %v961, %v1040
      %v1042 = vrcp.pop %v1007
      %v1043 = vmul.f32 %v963, %v1042
      %v1044 = vrcp.pop %v1010
      %v1045 = vmul.f32 %v965, %v1044
      %v1046 = vrcp.pop %v1013
      %v1047 = vmul.f32 %v967, %v1046
      %v1048 = vrcp.pop %v1016
      %v1049 = vmul.f32 %v969, %v1048
      %v1050 = vrcp.pop %v1019
      %v1051 = vmul.f32 %v971, %v1050
      %1052 = vst.msk [vmem:[%s396] sm:$0xff] %vm875, %v1021
      %1053 = vst.msk [vmem:[%s396 + $0x8] sm:$0xff] %vm875, %v1023
      %1054 = vst.msk [vmem:[%s396 + $0x10] sm:$0xff] %vm875, %v1025
      %1055 = vst.msk [vmem:[%s396 + $0x18] sm:$0xff] %vm875, %v1027
      %1056 = vst.msk [vmem:[%s396 + $0x20] sm:$0xff] %vm875, %v1029
      %1057 = vst.msk [vmem:[%s396 + $0x28] sm:$0xff] %vm875, %v1031
      %1058 = vst.msk [vmem:[%s396 + $0x30] sm:$0xff] %vm875, %v1033
      %1059 = vst.msk [vmem:[%s396 + $0x38] sm:$0xff] %vm875, %v1035
      %1060 = vst.msk [vmem:[%s396 + $0x40] sm:$0xff] %vm875, %v1037
      %1061 = vst.msk [vmem:[%s396 + $0x48] sm:$0xff] %vm875, %v1039
      %1062 = vst.msk [vmem:[%s396 + $0x50] sm:$0xff] %vm875, %v1041
      %1063 = vst.msk [vmem:[%s396 + $0x58] sm:$0xff] %vm875, %v1043
      %1064 = vst.msk [vmem:[%s396 + $0x60] sm:$0xff] %vm875, %v1045
      %1065 = vst.msk [vmem:[%s396 + $0x68] sm:$0xff] %vm875, %v1047
      %1066 = vst.msk [vmem:[%s396 + $0x70] sm:$0xff] %vm875, %v1049
      %1067 = vst.msk [vmem:[%s396 + $0x78] sm:$0xff] %vm875, %v1051
      %v1068 = vadd.f32 %v541, %v774
      %v1069 = vadd.f32 %v545, %v778
      %v1070 = vadd.f32 %v551, %v784
      %v1071 = vadd.f32 %v555, %v788
      %v1072 = vadd.f32 %v561, %v794
      %v1073 = vadd.f32 %v565, %v798
      %v1074 = vadd.f32 %v571, %v804
      %v1075 = vadd.f32 %v575, %v808
      %v1076 = vadd.f32 %v581, %v814
      %v1077 = vadd.f32 %v585, %v818
      %v1078 = vadd.f32 %v591, %v824
      %v1079 = vadd.f32 %v595, %v828
      %v1080 = vadd.f32 %v601, %v834
      %v1081 = vadd.f32 %v605, %v838
      %v1082 = vadd.f32 %v611, %v844
      %v1083 = vadd.f32 %v615, %v848
      %v1084 = vld [vmem:[%s5] sm:$0x1]
      %v1086 = vlaneseq
      %v1087 = vshrl.u32 %v1086, 7
      %v1088 = vsub.s32 0, %v1087
      %v1089 = vrot.slane %v1084, %v1088
      %v1091 = vadd.f32 %v1068, %v1089
      %v1092 = vadd.f32 %v1069, %v1089
      %v1093 = vadd.f32 %v1070, %v1089
      %v1094 = vadd.f32 %v1071, %v1089
      %v1095 = vadd.f32 %v1072, %v1089
      %v1096 = vadd.f32 %v1073, %v1089
      %v1097 = vadd.f32 %v1074, %v1089
      %v1098 = vadd.f32 %v1075, %v1089
      %v1099 = vadd.f32 %v1076, %v1089
      %v1100 = vadd.f32 %v1077, %v1089
      %v1101 = vadd.f32 %v1078, %v1089
      %v1102 = vadd.f32 %v1079, %v1089
      %v1103 = vadd.f32 %v1080, %v1089
      %v1104 = vadd.f32 %v1081, %v1089
      %v1105 = vadd.f32 %v1082, %v1089
      %v1106 = vadd.f32 %v1083, %v1089
      %v1107 = vmax.f32 %v1091, 0.0
      %v1108 = vmax.f32 %v1092, 0.0
      %v1109 = vmax.f32 %v1093, 0.0
      %v1110 = vmax.f32 %v1094, 0.0
      %v1111 = vmax.f32 %v1095, 0.0
      %v1112 = vmax.f32 %v1096, 0.0
      %v1113 = vmax.f32 %v1097, 0.0
      %v1114 = vmax.f32 %v1098, 0.0
      %v1115 = vmax.f32 %v1099, 0.0
      %v1116 = vmax.f32 %v1100, 0.0
      %v1117 = vmax.f32 %v1101, 0.0
      %v1118 = vmax.f32 %v1102, 0.0
      %v1119 = vmax.f32 %v1103, 0.0
      %v1120 = vmax.f32 %v1104, 0.0
      %v1121 = vmax.f32 %v1105, 0.0
      %v1122 = vmax.f32 %v1106, 0.0
      %v1123 = vpack.c.bf16 %v1108, %v1107
      %v1124 = vpack.c.bf16 %v1110, %v1109
      %v1125 = vpack.c.bf16 %v1112, %v1111
      %v1126 = vpack.c.bf16 %v1114, %v1113
      %v1127 = vpack.c.bf16 %v1116, %v1115
      %v1128 = vpack.c.bf16 %v1118, %v1117
      %v1129 = vpack.c.bf16 %v1120, %v1119
      %v1130 = vpack.c.bf16 %v1122, %v1121
      %v1131 = vld [vmem:[%s6] sm:$0xf]
      %v1132 = vld [vmem:[%s6 + $0x4] sm:$0xf]
      %v1133 = vld [vmem:[%s6 + $0x8] sm:$0xf]
      %v1134 = vld [vmem:[%s6 + $0xc] sm:$0xf]
      %v1135 = vld [vmem:[%s6 + $0x10] sm:$0xf]
      %v1136 = vld [vmem:[%s6 + $0x14] sm:$0xf]
      %v1137 = vld [vmem:[%s6 + $0x18] sm:$0xf]
      %v1138 = vld [vmem:[%s6 + $0x1c] sm:$0xf]
      %v1139 = vld [vmem:[%s6 + $0x20] sm:$0xf]
      %v1140 = vld [vmem:[%s6 + $0x24] sm:$0xf]
      %v1141 = vld [vmem:[%s6 + $0x28] sm:$0xf]
      %v1142 = vld [vmem:[%s6 + $0x2c] sm:$0xf]
      %v1143 = vld [vmem:[%s6 + $0x30] sm:$0xf]
      %v1144 = vld [vmem:[%s6 + $0x34] sm:$0xf]
      %v1145 = vld [vmem:[%s6 + $0x38] sm:$0xf]
      %v1146 = vld [vmem:[%s6 + $0x3c] sm:$0xf]
      %v1147 = vld [vmem:[%s7] sm:$0x1]
      %v1149 = vlaneseq
      %v1150 = vshrl.u32 %v1149, 7
      %v1151 = vsub.s32 0, %v1150
      %v1152 = vrot.slane %v1147, %v1151
      %v1170 = vunpack.c.l.b16 %v1131
      %v1171 = vunpack.c.l.b16 %v1132
      %v1172 = vunpack.c.l.b16 %v1133
      %v1173 = vunpack.c.l.b16 %v1134
      %v1174 = vunpack.c.l.b16 %v1135
      %v1175 = vunpack.c.l.b16 %v1136
      %v1176 = vunpack.c.l.b16 %v1137
      %v1177 = vunpack.c.l.b16 %v1138
      %v1178 = vunpack.c.l.b16 %v1139
      %v1179 = vunpack.c.l.b16 %v1140
      %v1180 = vunpack.c.l.b16 %v1141
      %v1181 = vunpack.c.l.b16 %v1142
      %v1182 = vunpack.c.l.b16 %v1143
      %v1183 = vunpack.c.l.b16 %v1144
      %v1184 = vunpack.c.l.b16 %v1145
      %v1185 = vunpack.c.l.b16 %v1146
      %v1186 = vpack.c.b16 %v1171, %v1170
      %v1187 = vpack.c.b16 %v1173, %v1172
      %v1188 = vpack.c.b16 %v1175, %v1174
      %v1189 = vpack.c.b16 %v1177, %v1176
      %v1190 = vpack.c.b16 %v1179, %v1178
      %v1191 = vpack.c.b16 %v1181, %v1180
      %v1192 = vpack.c.b16 %v1183, %v1182
      %v1193 = vpack.c.b16 %v1185, %v1184
      %1202 = vmatprep.subr.bf16.mxu0 0
      %1203 = vmatpush1.bf16.msra.mxu0 %v1186
      %1204 = vmatprep.subr.bf16.mxu0 0
      %1205 = vmatpush1.bf16.msra.mxu0 %v1187
      %1206 = vmatprep.subr.bf16.mxu0 0
      %1207 = vmatpush1.bf16.msra.mxu0 %v1188
      %1208 = vmatprep.subr.bf16.mxu0 0
      %1209 = vmatpush1.bf16.msra.mxu0 %v1189
      %1210 = vmatprep.subr.bf16.mxu0 0
      %1211 = vmatpush1.bf16.msra.mxu0 %v1190
      %1212 = vmatprep.subr.bf16.mxu0 0
      %1213 = vmatpush1.bf16.msra.mxu0 %v1191
      %1214 = vmatprep.subr.bf16.mxu0 0
      %1215 = vmatpush1.bf16.msra.mxu0 %v1192
      %1216 = vmatprep.subr.bf16.mxu0 0
      %1217 = vmatpush1.bf16.msra.mxu0 %v1193
      %1218 = vmatprep.subr.bf16.mxu0 0
      %1219 = vmatpush1.bf16.msra.mxu0 0
      %1220 = vmatprep.subr.bf16.mxu0 0
      %1221 = vmatpush1.bf16.msra.mxu0 0
      %1222 = vmatprep.subr.bf16.mxu0 0
      %1223 = vmatpush1.bf16.msra.mxu0 0
      %1224 = vmatprep.subr.bf16.mxu0 0
      %1225 = vmatpush1.bf16.msra.mxu0 0
      %1226 = vmatprep.subr.bf16.mxu0 0
      %1227 = vmatpush1.bf16.msra.mxu0 0
      %1228 = vmatprep.subr.bf16.mxu0 0
      %1229 = vmatpush1.bf16.msra.mxu0 0
      %1230 = vmatprep.subr.bf16.mxu0 0
      %1231 = vmatpush1.bf16.msra.mxu0 0
      %1232 = vmatprep.subr.bf16.mxu0 0
      %1233 = vmatpush1.bf16.msra.mxu0 0
      %1234 = vmatprep.mubr.bf16.mxu0 0
      %1235 = vmatmul.mubr.bf16.gmra.mrb[0].mxu0 %v1123
      %v1236 = vpop.f32.mrb[0].mxu0
      %v1237 = vadd.f32 %v1152, %v1236
      %v1238 = vpop.f32.mrb[0].mxu0
      %v1239 = vpop.f32.mrb[0].mxu0
      %v1240 = vadd.f32 %v1152, %v1239
      %v1241 = vpop.f32.mrb[0].mxu0
      %1242 = vmatprep.mubr.bf16.mxu0 0
      %1243 = vmatmul.mubr.bf16.gmra.mrb[0].mxu0 %v1124
      %v1244 = vpop.f32.mrb[0].mxu0
      %v1245 = vadd.f32 %v1152, %v1244
      %v1246 = vpop.f32.mrb[0].mxu0
      %v1247 = vpop.f32.mrb[0].mxu0
      %v1248 = vadd.f32 %v1152, %v1247
      %v1249 = vpop.f32.mrb[0].mxu0
      %1250 = vmatprep.mubr.bf16.mxu0 0
      %1251 = vmatmul.mubr.bf16.gmra.mrb[0].mxu0 %v1125
      %v1252 = vpop.f32.mrb[0].mxu0
      %v1253 = vadd.f32 %v1152, %v1252
      %v1254 = vpop.f32.mrb[0].mxu0
      %v1255 = vpop.f32.mrb[0].mxu0
      %v1256 = vadd.f32 %v1152, %v1255
      %v1257 = vpop.f32.mrb[0].mxu0
      %1258 = vmatprep.mubr.bf16.mxu0 0
      %1259 = vmatmul.mubr.bf16.gmra.mrb[0].mxu0 %v1126
      %v1260 = vpop.f32.mrb[0].mxu0
      %v1261 = vadd.f32 %v1152, %v1260
      %v1262 = vpop.f32.mrb[0].mxu0
      %v1263 = vpop.f32.mrb[0].mxu0
      %v1264 = vadd.f32 %v1152, %v1263
      %v1265 = vpop.f32.mrb[0].mxu0
      %1266 = vmatprep.mubr.bf16.mxu0 0
      %1267 = vmatmul.mubr.bf16.gmra.mrb[0].mxu0 %v1127
      %v1268 = vpop.f32.mrb[0].mxu0
      %v1269 = vadd.f32 %v1152, %v1268
      %v1270 = vpop.f32.mrb[0].mxu0
      %v1271 = vpop.f32.mrb[0].mxu0
      %v1272 = vadd.f32 %v1152, %v1271
      %v1273 = vpop.f32.mrb[0].mxu0
      %1274 = vmatprep.mubr.bf16.mxu0 0
      %1275 = vmatmul.mubr.bf16.gmra.mrb[0].mxu0 %v1128
      %v1276 = vpop.f32.mrb[0].mxu0
      %v1277 = vadd.f32 %v1152, %v1276
      %v1278 = vpop.f32.mrb[0].mxu0
      %v1279 = vpop.f32.mrb[0].mxu0
      %v1280 = vadd.f32 %v1152, %v1279
      %v1281 = vpop.f32.mrb[0].mxu0
      %1282 = vmatprep.mubr.bf16.mxu0 0
      %1283 = vmatmul.mubr.bf16.gmra.mrb[0].mxu0 %v1129
      %v1284 = vpop.f32.mrb[0].mxu0
      %v1285 = vadd.f32 %v1152, %v1284
      %v1286 = vpop.f32.mrb[0].mxu0
      %v1287 = vpop.f32.mrb[0].mxu0
      %v1288 = vadd.f32 %v1152, %v1287
      %v1289 = vpop.f32.mrb[0].mxu0
      %1290 = vmatprep.mubr.bf16.mxu0 0
      %1291 = vmatmul.mubr.bf16.gmra.mrb[0].mxu0 %v1130
      %v1292 = vpop.f32.mrb[0].mxu0
      %v1293 = vadd.f32 %v1152, %v1292
      %v1294 = vpop.f32.mrb[0].mxu0
      %v1295 = vpop.f32.mrb[0].mxu0
      %v1296 = vadd.f32 %v1152, %v1295
      %v1297 = vpop.f32.mrb[0].mxu0
      %1298 = vdwg.mxu0
      %v1299 = vmax.f32 %v1237, 0.0
      %v1300 = vmax.f32 %v1240, 0.0
      %v1301 = vmax.f32 %v1245, 0.0
      %v1302 = vmax.f32 %v1248, 0.0
      %v1303 = vmax.f32 %v1253, 0.0
      %v1304 = vmax.f32 %v1256, 0.0
      %v1305 = vmax.f32 %v1261, 0.0
      %v1306 = vmax.f32 %v1264, 0.0
      %v1307 = vmax.f32 %v1269, 0.0
      %v1308 = vmax.f32 %v1272, 0.0
      %v1309 = vmax.f32 %v1277, 0.0
      %v1310 = vmax.f32 %v1280, 0.0
      %v1311 = vmax.f32 %v1285, 0.0
      %v1312 = vmax.f32 %v1288, 0.0
      %v1313 = vmax.f32 %v1293, 0.0
      %v1314 = vmax.f32 %v1296, 0.0
      %v1315 = vpack.c.bf16 %v1300, %v1299
      %v1316 = vpack.c.bf16 %v1302, %v1301
      %v1317 = vpack.c.bf16 %v1304, %v1303
      %v1318 = vpack.c.bf16 %v1306, %v1305
      %v1319 = vpack.c.bf16 %v1308, %v1307
      %v1320 = vpack.c.bf16 %v1310, %v1309
      %v1321 = vpack.c.bf16 %v1312, %v1311
      %v1322 = vpack.c.bf16 %v1314, %v1313
      %s1323 = scalar_lea.vmem %s6, 64
      %v1324 = vld [vmem:[%s1323] sm:$0xf]
      %v1325 = vld [vmem:[%s1323 + $0x4] sm:$0xf]
      %v1326 = vld [vmem:[%s1323 + $0x8] sm:$0xf]
      %v1327 = vld [vmem:[%s1323 + $0xc] sm:$0xf]
      %v1328 = vld [vmem:[%s1323 + $0x10] sm:$0xf]
      %v1329 = vld [vmem:[%s1323 + $0x14] sm:$0xf]
      %v1330 = vld [vmem:[%s1323 + $0x18] sm:$0xf]
      %v1331 = vld [vmem:[%s1323 + $0x1c] sm:$0xf]
      %v1332 = vld [vmem:[%s1323 + $0x20] sm:$0xf]
      %v1333 = vld [vmem:[%s1323 + $0x24] sm:$0xf]
      %v1334 = vld [vmem:[%s1323 + $0x28] sm:$0xf]
      %v1335 = vld [vmem:[%s1323 + $0x2c] sm:$0xf]
      %v1336 = vld [vmem:[%s1323 + $0x30] sm:$0xf]
      %v1337 = vld [vmem:[%s1323 + $0x34] sm:$0xf]
      %v1338 = vld [vmem:[%s1323 + $0x38] sm:$0xf]
      %v1339 = vld [vmem:[%s1323 + $0x3c] sm:$0xf]
      %s1340 = scalar_lea.vmem %s7, 1
      %v1341 = vld [vmem:[%s1340] sm:$0x1]
      %v1343 = vlaneseq
      %v1344 = vshrl.u32 %v1343, 7
      %v1345 = vsub.s32 0, %v1344
      %v1346 = vrot.slane %v1341, %v1345
      %v1364 = vunpack.c.l.b16 %v1324
      %v1365 = vunpack.c.l.b16 %v1325
      %v1366 = vunpack.c.l.b16 %v1326
      %v1367 = vunpack.c.l.b16 %v1327
      %v1368 = vunpack.c.l.b16 %v1328
      %v1369 = vunpack.c.l.b16 %v1329
      %v1370 = vunpack.c.l.b16 %v1330
      %v1371 = vunpack.c.l.b16 %v1331
      %v1372 = vunpack.c.l.b16 %v1332
      %v1373 = vunpack.c.l.b16 %v1333
      %v1374 = vunpack.c.l.b16 %v1334
      %v1375 = vunpack.c.l.b16 %v1335
      %v1376 = vunpack.c.l.b16 %v1336
      %v1377 = vunpack.c.l.b16 %v1337
      %v1378 = vunpack.c.l.b16 %v1338
      %v1379 = vunpack.c.l.b16 %v1339
      %v1380 = vpack.c.b16 %v1365, %v1364
      %v1381 = vpack.c.b16 %v1367, %v1366
      %v1382 = vpack.c.b16 %v1369, %v1368
      %v1383 = vpack.c.b16 %v1371, %v1370
      %v1384 = vpack.c.b16 %v1373, %v1372
      %v1385 = vpack.c.b16 %v1375, %v1374
      %v1386 = vpack.c.b16 %v1377, %v1376
      %v1387 = vpack.c.b16 %v1379, %v1378
      %1396 = vmatprep.subr.bf16.mxu0 0
      %1397 = vmatpush1.bf16.msra.mxu0 %v1380
      %1398 = vmatprep.subr.bf16.mxu0 0
      %1399 = vmatpush1.bf16.msra.mxu0 %v1381
      %1400 = vmatprep.subr.bf16.mxu0 0
      %1401 = vmatpush1.bf16.msra.mxu0 %v1382
      %1402 = vmatprep.subr.bf16.mxu0 0
      %1403 = vmatpush1.bf16.msra.mxu0 %v1383
      %1404 = vmatprep.subr.bf16.mxu0 0
      %1405 = vmatpush1.bf16.msra.mxu0 %v1384
      %1406 = vmatprep.subr.bf16.mxu0 0
      %1407 = vmatpush1.bf16.msra.mxu0 %v1385
      %1408 = vmatprep.subr.bf16.mxu0 0
      %1409 = vmatpush1.bf16.msra.mxu0 %v1386
      %1410 = vmatprep.subr.bf16.mxu0 0
      %1411 = vmatpush1.bf16.msra.mxu0 %v1387
      %1412 = vmatprep.subr.bf16.mxu0 0
      %1413 = vmatpush1.bf16.msra.mxu0 0
      %1414 = vmatprep.subr.bf16.mxu0 0
      %1415 = vmatpush1.bf16.msra.mxu0 0
      %1416 = vmatprep.subr.bf16.mxu0 0
      %1417 = vmatpush1.bf16.msra.mxu0 0
      %1418 = vmatprep.subr.bf16.mxu0 0
      %1419 = vmatpush1.bf16.msra.mxu0 0
      %1420 = vmatprep.subr.bf16.mxu0 0
      %1421 = vmatpush1.bf16.msra.mxu0 0
      %1422 = vmatprep.subr.bf16.mxu0 0
      %1423 = vmatpush1.bf16.msra.mxu0 0
      %1424 = vmatprep.subr.bf16.mxu0 0
      %1425 = vmatpush1.bf16.msra.mxu0 0
      %1426 = vmatprep.subr.bf16.mxu0 0
      %1427 = vmatpush1.bf16.msra.mxu0 0
      %1428 = vmatprep.mubr.bf16.mxu0 0
      %1429 = vmatmul.mubr.bf16.gmra.mrb[0].mxu0 %v1315
      %v1430 = vpop.f32.mrb[0].mxu0
      %v1431 = vadd.f32 %v1346, %v1430
      %v1432 = vpop.f32.mrb[0].mxu0
      %v1433 = vpop.f32.mrb[0].mxu0
      %v1434 = vadd.f32 %v1346, %v1433
      %v1435 = vpop.f32.mrb[0].mxu0
      %1436 = vmatprep.mubr.bf16.mxu0 0
      %1437 = vmatmul.mubr.bf16.gmra.mrb[0].mxu0 %v1316
      %v1438 = vpop.f32.mrb[0].mxu0
      %v1439 = vadd.f32 %v1346, %v1438
      %v1440 = vpop.f32.mrb[0].mxu0
      %v1441 = vpop.f32.mrb[0].mxu0
      %v1442 = vadd.f32 %v1346, %v1441
      %v1443 = vpop.f32.mrb[0].mxu0
      %1444 = vmatprep.mubr.bf16.mxu0 0
      %1445 = vmatmul.mubr.bf16.gmra.mrb[0].mxu0 %v1317
      %v1446 = vpop.f32.mrb[0].mxu0
      %v1447 = vadd.f32 %v1346, %v1446
      %v1448 = vpop.f32.mrb[0].mxu0
      %v1449 = vpop.f32.mrb[0].mxu0
      %v1450 = vadd.f32 %v1346, %v1449
      %v1451 = vpop.f32.mrb[0].mxu0
      %1452 = vmatprep.mubr.bf16.mxu0 0
      %1453 = vmatmul.mubr.bf16.gmra.mrb[0].mxu0 %v1318
      %v1454 = vpop.f32.mrb[0].mxu0
      %v1455 = vadd.f32 %v1346, %v1454
      %v1456 = vpop.f32.mrb[0].mxu0
      %v1457 = vpop.f32.mrb[0].mxu0
      %v1458 = vadd.f32 %v1346, %v1457
      %v1459 = vpop.f32.mrb[0].mxu0
      %1460 = vmatprep.mubr.bf16.mxu0 0
      %1461 = vmatmul.mubr.bf16.gmra.mrb[0].mxu0 %v1319
      %v1462 = vpop.f32.mrb[0].mxu0
      %v1463 = vadd.f32 %v1346, %v1462
      %v1464 = vpop.f32.mrb[0].mxu0
      %v1465 = vpop.f32.mrb[0].mxu0
      %v1466 = vadd.f32 %v1346, %v1465
      %v1467 = vpop.f32.mrb[0].mxu0
      %1468 = vmatprep.mubr.bf16.mxu0 0
      %1469 = vmatmul.mubr.bf16.gmra.mrb[0].mxu0 %v1320
      %v1470 = vpop.f32.mrb[0].mxu0
      %v1471 = vadd.f32 %v1346, %v1470
      %v1472 = vpop.f32.mrb[0].mxu0
      %v1473 = vpop.f32.mrb[0].mxu0
      %v1474 = vadd.f32 %v1346, %v1473
      %v1475 = vpop.f32.mrb[0].mxu0
      %1476 = vmatprep.mubr.bf16.mxu0 0
      %1477 = vmatmul.mubr.bf16.gmra.mrb[0].mxu0 %v1321
      %v1478 = vpop.f32.mrb[0].mxu0
      %v1479 = vadd.f32 %v1346, %v1478
      %v1480 = vpop.f32.mrb[0].mxu0
      %v1481 = vpop.f32.mrb[0].mxu0
      %v1482 = vadd.f32 %v1346, %v1481
      %v1483 = vpop.f32.mrb[0].mxu0
      %1484 = vmatprep.mubr.bf16.mxu0 0
      %1485 = vmatmul.mubr.bf16.gmra.mrb[0].mxu0 %v1322
      %v1486 = vpop.f32.mrb[0].mxu0
      %v1487 = vadd.f32 %v1346, %v1486
      %v1488 = vpop.f32.mrb[0].mxu0
      %v1489 = vpop.f32.mrb[0].mxu0
      %v1490 = vadd.f32 %v1346, %v1489
      %v1491 = vpop.f32.mrb[0].mxu0
      %1492 = vdwg.mxu0
      %v1493 = vmax.f32 %v1431, 0.0
      %v1494 = vmax.f32 %v1434, 0.0
      %v1495 = vmax.f32 %v1439, 0.0
      %v1496 = vmax.f32 %v1442, 0.0
      %v1497 = vmax.f32 %v1447, 0.0
      %v1498 = vmax.f32 %v1450, 0.0
      %v1499 = vmax.f32 %v1455, 0.0
      %v1500 = vmax.f32 %v1458, 0.0
      %v1501 = vmax.f32 %v1463, 0.0
      %v1502 = vmax.f32 %v1466, 0.0
      %v1503 = vmax.f32 %v1471, 0.0
      %v1504 = vmax.f32 %v1474, 0.0
      %v1505 = vmax.f32 %v1479, 0.0
      %v1506 = vmax.f32 %v1482, 0.0
      %v1507 = vmax.f32 %v1487, 0.0
      %v1508 = vmax.f32 %v1490, 0.0
      %v1509 = vpack.c.bf16 %v1494, %v1493
      %v1510 = vpack.c.bf16 %v1496, %v1495
      %v1511 = vpack.c.bf16 %v1498, %v1497
      %v1512 = vpack.c.bf16 %v1500, %v1499
      %v1513 = vpack.c.bf16 %v1502, %v1501
      %v1514 = vpack.c.bf16 %v1504, %v1503
      %v1515 = vpack.c.bf16 %v1506, %v1505
      %v1516 = vpack.c.bf16 %v1508, %v1507
      %s1517 = scalar_lea.vmem %s6, 128
      %v1518 = vld [vmem:[%s1517] sm:$0xf]
      %v1519 = vld [vmem:[%s1517 + $0x4] sm:$0xf]
      %v1520 = vld [vmem:[%s1517 + $0x8] sm:$0xf]
      %v1521 = vld [vmem:[%s1517 + $0xc] sm:$0xf]
      %v1522 = vld [vmem:[%s1517 + $0x10] sm:$0xf]
      %v1523 = vld [vmem:[%s1517 + $0x14] sm:$0xf]
      %v1524 = vld [vmem:[%s1517 + $0x18] sm:$0xf]
      %v1525 = vld [vmem:[%s1517 + $0x1c] sm:$0xf]
      %v1526 = vld [vmem:[%s1517 + $0x20] sm:$0xf]
      %v1527 = vld [vmem:[%s1517 + $0x24] sm:$0xf]
      %v1528 = vld [vmem:[%s1517 + $0x28] sm:$0xf]
      %v1529 = vld [vmem:[%s1517 + $0x2c] sm:$0xf]
      %v1530 = vld [vmem:[%s1517 + $0x30] sm:$0xf]
      %v1531 = vld [vmem:[%s1517 + $0x34] sm:$0xf]
      %v1532 = vld [vmem:[%s1517 + $0x38] sm:$0xf]
      %v1533 = vld [vmem:[%s1517 + $0x3c] sm:$0xf]
      %s1534 = scalar_lea.vmem %s7, 2
      %v1535 = vld [vmem:[%s1534] sm:$0x1]
      %v1537 = vlaneseq
      %v1538 = vshrl.u32 %v1537, 7
      %v1539 = vsub.s32 0, %v1538
      %v1540 = vrot.slane %v1535, %v1539
      %v1558 = vunpack.c.l.b16 %v1518
      %v1559 = vunpack.c.l.b16 %v1519
      %v1560 = vunpack.c.l.b16 %v1520
      %v1561 = vunpack.c.l.b16 %v1521
      %v1562 = vunpack.c.l.b16 %v1522
      %v1563 = vunpack.c.l.b16 %v1523
      %v1564 = vunpack.c.l.b16 %v1524
      %v1565 = vunpack.c.l.b16 %v1525
      %v1566 = vunpack.c.l.b16 %v1526
      %v1567 = vunpack.c.l.b16 %v1527
      %v1568 = vunpack.c.l.b16 %v1528
      %v1569 = vunpack.c.l.b16 %v1529
      %v1570 = vunpack.c.l.b16 %v1530
      %v1571 = vunpack.c.l.b16 %v1531
      %v1572 = vunpack.c.l.b16 %v1532
      %v1573 = vunpack.c.l.b16 %v1533
      %v1574 = vpack.c.b16 %v1559, %v1558
      %v1575 = vpack.c.b16 %v1561, %v1560
      %v1576 = vpack.c.b16 %v1563, %v1562
      %v1577 = vpack.c.b16 %v1565, %v1564
      %v1578 = vpack.c.b16 %v1567, %v1566
      %v1579 = vpack.c.b16 %v1569, %v1568
      %v1580 = vpack.c.b16 %v1571, %v1570
      %v1581 = vpack.c.b16 %v1573, %v1572
      %1590 = vmatprep.subr.bf16.mxu0 0
      %1591 = vmatpush1.bf16.msra.mxu0 %v1574
      %1592 = vmatprep.subr.bf16.mxu0 0
      %1593 = vmatpush1.bf16.msra.mxu0 %v1575
      %1594 = vmatprep.subr.bf16.mxu0 0
      %1595 = vmatpush1.bf16.msra.mxu0 %v1576
      %1596 = vmatprep.subr.bf16.mxu0 0
      %1597 = vmatpush1.bf16.msra.mxu0 %v1577
      %1598 = vmatprep.subr.bf16.mxu0 0
      %1599 = vmatpush1.bf16.msra.mxu0 %v1578
      %1600 = vmatprep.subr.bf16.mxu0 0
      %1601 = vmatpush1.bf16.msra.mxu0 %v1579
      %1602 = vmatprep.subr.bf16.mxu0 0
      %1603 = vmatpush1.bf16.msra.mxu0 %v1580
      %1604 = vmatprep.subr.bf16.mxu0 0
      %1605 = vmatpush1.bf16.msra.mxu0 %v1581
      %1606 = vmatprep.subr.bf16.mxu0 0
      %1607 = vmatpush1.bf16.msra.mxu0 0
      %1608 = vmatprep.subr.bf16.mxu0 0
      %1609 = vmatpush1.bf16.msra.mxu0 0
      %1610 = vmatprep.subr.bf16.mxu0 0
      %1611 = vmatpush1.bf16.msra.mxu0 0
      %1612 = vmatprep.subr.bf16.mxu0 0
      %1613 = vmatpush1.bf16.msra.mxu0 0
      %1614 = vmatprep.subr.bf16.mxu0 0
      %1615 = vmatpush1.bf16.msra.mxu0 0
      %1616 = vmatprep.subr.bf16.mxu0 0
      %1617 = vmatpush1.bf16.msra.mxu0 0
      %1618 = vmatprep.subr.bf16.mxu0 0
      %1619 = vmatpush1.bf16.msra.mxu0 0
      %1620 = vmatprep.subr.bf16.mxu0 0
      %1621 = vmatpush1.bf16.msra.mxu0 0
      %1622 = vmatprep.mubr.bf16.mxu0 0
      %1623 = vmatmul.mubr.bf16.gmra.mrb[0].mxu0 %v1509
      %v1624 = vpop.f32.mrb[0].mxu0
      %v1625 = vadd.f32 %v1540, %v1624
      %v1626 = vpop.f32.mrb[0].mxu0
      %v1627 = vpop.f32.mrb[0].mxu0
      %v1628 = vadd.f32 %v1540, %v1627
      %v1629 = vpop.f32.mrb[0].mxu0
      %1630 = vmatprep.mubr.bf16.mxu0 0
      %1631 = vmatmul.mubr.bf16.gmra.mrb[0].mxu0 %v1510
      %v1632 = vpop.f32.mrb[0].mxu0
      %v1633 = vadd.f32 %v1540, %v1632
      %v1634 = vpop.f32.mrb[0].mxu0
      %v1635 = vpop.f32.mrb[0].mxu0
      %v1636 = vadd.f32 %v1540, %v1635
      %v1637 = vpop.f32.mrb[0].mxu0
      %1638 = vmatprep.mubr.bf16.mxu0 0
      %1639 = vmatmul.mubr.bf16.gmra.mrb[0].mxu0 %v1511
      %v1640 = vpop.f32.mrb[0].mxu0
      %v1641 = vadd.f32 %v1540, %v1640
      %v1642 = vpop.f32.mrb[0].mxu0
      %v1643 = vpop.f32.mrb[0].mxu0
      %v1644 = vadd.f32 %v1540, %v1643
      %v1645 = vpop.f32.mrb[0].mxu0
      %1646 = vmatprep.mubr.bf16.mxu0 0
      %1647 = vmatmul.mubr.bf16.gmra.mrb[0].mxu0 %v1512
      %v1648 = vpop.f32.mrb[0].mxu0
      %v1649 = vadd.f32 %v1540, %v1648
      %v1650 = vpop.f32.mrb[0].mxu0
      %v1651 = vpop.f32.mrb[0].mxu0
      %v1652 = vadd.f32 %v1540, %v1651
      %v1653 = vpop.f32.mrb[0].mxu0
      %1654 = vmatprep.mubr.bf16.mxu0 0
      %1655 = vmatmul.mubr.bf16.gmra.mrb[0].mxu0 %v1513
      %v1656 = vpop.f32.mrb[0].mxu0
      %v1657 = vadd.f32 %v1540, %v1656
      %v1658 = vpop.f32.mrb[0].mxu0
      %v1659 = vpop.f32.mrb[0].mxu0
      %v1660 = vadd.f32 %v1540, %v1659
      %v1661 = vpop.f32.mrb[0].mxu0
      %1662 = vmatprep.mubr.bf16.mxu0 0
      %1663 = vmatmul.mubr.bf16.gmra.mrb[0].mxu0 %v1514
      %v1664 = vpop.f32.mrb[0].mxu0
      %v1665 = vadd.f32 %v1540, %v1664
      %v1666 = vpop.f32.mrb[0].mxu0
      %v1667 = vpop.f32.mrb[0].mxu0
      %v1668 = vadd.f32 %v1540, %v1667
      %v1669 = vpop.f32.mrb[0].mxu0
      %1670 = vmatprep.mubr.bf16.mxu0 0
      %1671 = vmatmul.mubr.bf16.gmra.mrb[0].mxu0 %v1515
      %v1672 = vpop.f32.mrb[0].mxu0
      %v1673 = vadd.f32 %v1540, %v1672
      %v1674 = vpop.f32.mrb[0].mxu0
      %v1675 = vpop.f32.mrb[0].mxu0
      %v1676 = vadd.f32 %v1540, %v1675
      %v1677 = vpop.f32.mrb[0].mxu0
      %1678 = vmatprep.mubr.bf16.mxu0 0
      %1679 = vmatmul.mubr.bf16.gmra.mrb[0].mxu0 %v1516
      %v1680 = vpop.f32.mrb[0].mxu0
      %v1681 = vadd.f32 %v1540, %v1680
      %v1682 = vpop.f32.mrb[0].mxu0
      %v1683 = vpop.f32.mrb[0].mxu0
      %v1684 = vadd.f32 %v1540, %v1683
      %v1685 = vpop.f32.mrb[0].mxu0
      %1686 = vdwg.mxu0
      %v1687 = vmax.f32 %v1625, 0.0
      %v1688 = vmax.f32 %v1628, 0.0
      %v1689 = vmax.f32 %v1633, 0.0
      %v1690 = vmax.f32 %v1636, 0.0
      %v1691 = vmax.f32 %v1641, 0.0
      %v1692 = vmax.f32 %v1644, 0.0
      %v1693 = vmax.f32 %v1649, 0.0
      %v1694 = vmax.f32 %v1652, 0.0
      %v1695 = vmax.f32 %v1657, 0.0
      %v1696 = vmax.f32 %v1660, 0.0
      %v1697 = vmax.f32 %v1665, 0.0
      %v1698 = vmax.f32 %v1668, 0.0
      %v1699 = vmax.f32 %v1673, 0.0
      %v1700 = vmax.f32 %v1676, 0.0
      %v1701 = vmax.f32 %v1681, 0.0
      %v1702 = vmax.f32 %v1684, 0.0
      %v1703 = vpack.c.bf16 %v1688, %v1687
      %v1704 = vpack.c.bf16 %v1690, %v1689
      %v1705 = vpack.c.bf16 %v1692, %v1691
      %v1706 = vpack.c.bf16 %v1694, %v1693
      %v1707 = vpack.c.bf16 %v1696, %v1695
      %v1708 = vpack.c.bf16 %v1698, %v1697
      %v1709 = vpack.c.bf16 %v1700, %v1699
      %v1710 = vpack.c.bf16 %v1702, %v1701
      %s1711 = scalar_lea.vmem %s6, 192
      %v1712 = vld [vmem:[%s1711] sm:$0xf]
      %v1713 = vld [vmem:[%s1711 + $0x4] sm:$0xf]
      %v1714 = vld [vmem:[%s1711 + $0x8] sm:$0xf]
      %v1715 = vld [vmem:[%s1711 + $0xc] sm:$0xf]
      %v1716 = vld [vmem:[%s1711 + $0x10] sm:$0xf]
      %v1717 = vld [vmem:[%s1711 + $0x14] sm:$0xf]
      %v1718 = vld [vmem:[%s1711 + $0x18] sm:$0xf]
      %v1719 = vld [vmem:[%s1711 + $0x1c] sm:$0xf]
      %v1720 = vld [vmem:[%s1711 + $0x20] sm:$0xf]
      %v1721 = vld [vmem:[%s1711 + $0x24] sm:$0xf]
      %v1722 = vld [vmem:[%s1711 + $0x28] sm:$0xf]
      %v1723 = vld [vmem:[%s1711 + $0x2c] sm:$0xf]
      %v1724 = vld [vmem:[%s1711 + $0x30] sm:$0xf]
      %v1725 = vld [vmem:[%s1711 + $0x34] sm:$0xf]
      %v1726 = vld [vmem:[%s1711 + $0x38] sm:$0xf]
      %v1727 = vld [vmem:[%s1711 + $0x3c] sm:$0xf]
      %s1728 = scalar_lea.vmem %s7, 3
      %v1729 = vld [vmem:[%s1728] sm:$0x1]
      %v1731 = vlaneseq
      %v1732 = vshrl.u32 %v1731, 7
      %v1733 = vsub.s32 0, %v1732
      %v1734 = vrot.slane %v1729, %v1733
      %v1752 = vunpack.c.l.b16 %v1712
      %v1753 = vunpack.c.l.b16 %v1713
      %v1754 = vunpack.c.l.b16 %v1714
      %v1755 = vunpack.c.l.b16 %v1715
      %v1756 = vunpack.c.l.b16 %v1716
      %v1757 = vunpack.c.l.b16 %v1717
      %v1758 = vunpack.c.l.b16 %v1718
      %v1759 = vunpack.c.l.b16 %v1719
      %v1760 = vunpack.c.l.b16 %v1720
      %v1761 = vunpack.c.l.b16 %v1721
      %v1762 = vunpack.c.l.b16 %v1722
      %v1763 = vunpack.c.l.b16 %v1723
      %v1764 = vunpack.c.l.b16 %v1724
      %v1765 = vunpack.c.l.b16 %v1725
      %v1766 = vunpack.c.l.b16 %v1726
      %v1767 = vunpack.c.l.b16 %v1727
      %v1768 = vpack.c.b16 %v1753, %v1752
      %v1769 = vpack.c.b16 %v1755, %v1754
      %v1770 = vpack.c.b16 %v1757, %v1756
      %v1771 = vpack.c.b16 %v1759, %v1758
      %v1772 = vpack.c.b16 %v1761, %v1760
      %v1773 = vpack.c.b16 %v1763, %v1762
      %v1774 = vpack.c.b16 %v1765, %v1764
      %v1775 = vpack.c.b16 %v1767, %v1766
      %1784 = vmatprep.subr.bf16.mxu0 0
      %1785 = vmatpush1.bf16.msra.mxu0 %v1768
      %1786 = vmatprep.subr.bf16.mxu0 0
      %1787 = vmatpush1.bf16.msra.mxu0 %v1769
      %1788 = vmatprep.subr.bf16.mxu0 0
      %1789 = vmatpush1.bf16.msra.mxu0 %v1770
      %1790 = vmatprep.subr.bf16.mxu0 0
      %1791 = vmatpush1.bf16.msra.mxu0 %v1771
      %1792 = vmatprep.subr.bf16.mxu0 0
      %1793 = vmatpush1.bf16.msra.mxu0 %v1772
      %1794 = vmatprep.subr.bf16.mxu0 0
      %1795 = vmatpush1.bf16.msra.mxu0 %v1773
      %1796 = vmatprep.subr.bf16.mxu0 0
      %1797 = vmatpush1.bf16.msra.mxu0 %v1774
      %1798 = vmatprep.subr.bf16.mxu0 0
      %1799 = vmatpush1.bf16.msra.mxu0 %v1775
      %1800 = vmatprep.subr.bf16.mxu0 0
      %1801 = vmatpush1.bf16.msra.mxu0 0
      %1802 = vmatprep.subr.bf16.mxu0 0
      %1803 = vmatpush1.bf16.msra.mxu0 0
      %1804 = vmatprep.subr.bf16.mxu0 0
      %1805 = vmatpush1.bf16.msra.mxu0 0
      %1806 = vmatprep.subr.bf16.mxu0 0
      %1807 = vmatpush1.bf16.msra.mxu0 0
      %1808 = vmatprep.subr.bf16.mxu0 0
      %1809 = vmatpush1.bf16.msra.mxu0 0
      %1810 = vmatprep.subr.bf16.mxu0 0
      %1811 = vmatpush1.bf16.msra.mxu0 0
      %1812 = vmatprep.subr.bf16.mxu0 0
      %1813 = vmatpush1.bf16.msra.mxu0 0
      %1814 = vmatprep.subr.bf16.mxu0 0
      %1815 = vmatpush1.bf16.msra.mxu0 0
      %1816 = vmatprep.mubr.bf16.mxu0 0
      %1817 = vmatmul.mubr.bf16.gmra.mrb[0].mxu0 %v1703
      %v1818 = vpop.f32.mrb[0].mxu0
      %v1819 = vadd.f32 %v1734, %v1818
      %v1820 = vpop.f32.mrb[0].mxu0
      %v1821 = vpop.f32.mrb[0].mxu0
      %v1822 = vadd.f32 %v1734, %v1821
      %v1823 = vpop.f32.mrb[0].mxu0
      %1824 = vmatprep.mubr.bf16.mxu0 0
      %1825 = vmatmul.mubr.bf16.gmra.mrb[0].mxu0 %v1704
      %v1826 = vpop.f32.mrb[0].mxu0
      %v1827 = vadd.f32 %v1734, %v1826
      %v1828 = vpop.f32.mrb[0].mxu0
      %v1829 = vpop.f32.mrb[0].mxu0
      %v1830 = vadd.f32 %v1734, %v1829
      %v1831 = vpop.f32.mrb[0].mxu0
      %1832 = vmatprep.mubr.bf16.mxu0 0
      %1833 = vmatmul.mubr.bf16.gmra.mrb[0].mxu0 %v1705
      %v1834 = vpop.f32.mrb[0].mxu0
      %v1835 = vadd.f32 %v1734, %v1834
      %v1836 = vpop.f32.mrb[0].mxu0
      %v1837 = vpop.f32.mrb[0].mxu0
      %v1838 = vadd.f32 %v1734, %v1837
      %v1839 = vpop.f32.mrb[0].mxu0
      %1840 = vmatprep.mubr.bf16.mxu0 0
      %1841 = vmatmul.mubr.bf16.gmra.mrb[0].mxu0 %v1706
      %v1842 = vpop.f32.mrb[0].mxu0
      %v1843 = vadd.f32 %v1734, %v1842
      %v1844 = vpop.f32.mrb[0].mxu0
      %v1845 = vpop.f32.mrb[0].mxu0
      %v1846 = vadd.f32 %v1734, %v1845
      %v1847 = vpop.f32.mrb[0].mxu0
      %1848 = vmatprep.mubr.bf16.mxu0 0
      %1849 = vmatmul.mubr.bf16.gmra.mrb[0].mxu0 %v1707
      %v1850 = vpop.f32.mrb[0].mxu0
      %v1851 = vadd.f32 %v1734, %v1850
      %v1852 = vpop.f32.mrb[0].mxu0
      %v1853 = vpop.f32.mrb[0].mxu0
      %v1854 = vadd.f32 %v1734, %v1853
      %v1855 = vpop.f32.mrb[0].mxu0
      %1856 = vmatprep.mubr.bf16.mxu0 0
      %1857 = vmatmul.mubr.bf16.gmra.mrb[0].mxu0 %v1708
      %v1858 = vpop.f32.mrb[0].mxu0
      %v1859 = vadd.f32 %v1734, %v1858
      %v1860 = vpop.f32.mrb[0].mxu0
      %v1861 = vpop.f32.mrb[0].mxu0
      %v1862 = vadd.f32 %v1734, %v1861
      %v1863 = vpop.f32.mrb[0].mxu0
      %1864 = vmatprep.mubr.bf16.mxu0 0
      %1865 = vmatmul.mubr.bf16.gmra.mrb[0].mxu0 %v1709
      %v1866 = vpop.f32.mrb[0].mxu0
      %v1867 = vadd.f32 %v1734, %v1866
      %v1868 = vpop.f32.mrb[0].mxu0
      %v1869 = vpop.f32.mrb[0].mxu0
      %v1870 = vadd.f32 %v1734, %v1869
      %v1871 = vpop.f32.mrb[0].mxu0
      %1872 = vmatprep.mubr.bf16.mxu0 0
      %1873 = vmatmul.mubr.bf16.gmra.mrb[0].mxu0 %v1710
      %v1874 = vpop.f32.mrb[0].mxu0
      %v1875 = vadd.f32 %v1734, %v1874
      %v1876 = vpop.f32.mrb[0].mxu0
      %v1877 = vpop.f32.mrb[0].mxu0
      %v1878 = vadd.f32 %v1734, %v1877
      %v1879 = vpop.f32.mrb[0].mxu0
      %1880 = vdwg.mxu0
      %v1881 = vmax.f32 %v1819, 0.0
      %v1882 = vmax.f32 %v1822, 0.0
      %v1883 = vmax.f32 %v1827, 0.0
      %v1884 = vmax.f32 %v1830, 0.0
      %v1885 = vmax.f32 %v1835, 0.0
      %v1886 = vmax.f32 %v1838, 0.0
      %v1887 = vmax.f32 %v1843, 0.0
      %v1888 = vmax.f32 %v1846, 0.0
      %v1889 = vmax.f32 %v1851, 0.0
      %v1890 = vmax.f32 %v1854, 0.0
      %v1891 = vmax.f32 %v1859, 0.0
      %v1892 = vmax.f32 %v1862, 0.0
      %v1893 = vmax.f32 %v1867, 0.0
      %v1894 = vmax.f32 %v1870, 0.0
      %v1895 = vmax.f32 %v1875, 0.0
      %v1896 = vmax.f32 %v1878, 0.0
      %v1897 = vpack.c.bf16 %v1882, %v1881
      %v1898 = vpack.c.bf16 %v1884, %v1883
      %v1899 = vpack.c.bf16 %v1886, %v1885
      %v1900 = vpack.c.bf16 %v1888, %v1887
      %v1901 = vpack.c.bf16 %v1890, %v1889
      %v1902 = vpack.c.bf16 %v1892, %v1891
      %v1903 = vpack.c.bf16 %v1894, %v1893
      %v1904 = vpack.c.bf16 %v1896, %v1895
      %s1905 = scalar_lea.vmem %s6, 256
      %v1906 = vld [vmem:[%s1905] sm:$0xf]
      %v1907 = vld [vmem:[%s1905 + $0x4] sm:$0xf]
      %v1908 = vld [vmem:[%s1905 + $0x8] sm:$0xf]
      %v1909 = vld [vmem:[%s1905 + $0xc] sm:$0xf]
      %v1910 = vld [vmem:[%s1905 + $0x10] sm:$0xf]
      %v1911 = vld [vmem:[%s1905 + $0x14] sm:$0xf]
      %v1912 = vld [vmem:[%s1905 + $0x18] sm:$0xf]
      %v1913 = vld [vmem:[%s1905 + $0x1c] sm:$0xf]
      %v1914 = vld [vmem:[%s1905 + $0x20] sm:$0xf]
      %v1915 = vld [vmem:[%s1905 + $0x24] sm:$0xf]
      %v1916 = vld [vmem:[%s1905 + $0x28] sm:$0xf]
      %v1917 = vld [vmem:[%s1905 + $0x2c] sm:$0xf]
      %v1918 = vld [vmem:[%s1905 + $0x30] sm:$0xf]
      %v1919 = vld [vmem:[%s1905 + $0x34] sm:$0xf]
      %v1920 = vld [vmem:[%s1905 + $0x38] sm:$0xf]
      %v1921 = vld [vmem:[%s1905 + $0x3c] sm:$0xf]
      %s1922 = scalar_lea.vmem %s7, 4
      %v1923 = vld [vmem:[%s1922] sm:$0x1]
      %v1925 = vlaneseq
      %v1926 = vshrl.u32 %v1925, 7
      %v1927 = vsub.s32 0, %v1926
      %v1928 = vrot.slane %v1923, %v1927
      %v1946 = vunpack.c.l.b16 %v1906
      %v1947 = vunpack.c.l.b16 %v1907
      %v1948 = vunpack.c.l.b16 %v1908
      %v1949 = vunpack.c.l.b16 %v1909
      %v1950 = vunpack.c.l.b16 %v1910
      %v1951 = vunpack.c.l.b16 %v1911
      %v1952 = vunpack.c.l.b16 %v1912
      %v1953 = vunpack.c.l.b16 %v1913
      %v1954 = vunpack.c.l.b16 %v1914
      %v1955 = vunpack.c.l.b16 %v1915
      %v1956 = vunpack.c.l.b16 %v1916
      %v1957 = vunpack.c.l.b16 %v1917
      %v1958 = vunpack.c.l.b16 %v1918
      %v1959 = vunpack.c.l.b16 %v1919
      %v1960 = vunpack.c.l.b16 %v1920
      %v1961 = vunpack.c.l.b16 %v1921
      %v1962 = vpack.c.b16 %v1947, %v1946
      %v1963 = vpack.c.b16 %v1949, %v1948
      %v1964 = vpack.c.b16 %v1951, %v1950
      %v1965 = vpack.c.b16 %v1953, %v1952
      %v1966 = vpack.c.b16 %v1955, %v1954
      %v1967 = vpack.c.b16 %v1957, %v1956
      %v1968 = vpack.c.b16 %v1959, %v1958
      %v1969 = vpack.c.b16 %v1961, %v1960
      %1978 = vmatprep.subr.bf16.mxu0 0
      %1979 = vmatpush1.bf16.msra.mxu0 %v1962
      %1980 = vmatprep.subr.bf16.mxu0 0
      %1981 = vmatpush1.bf16.msra.mxu0 %v1963
      %1982 = vmatprep.subr.bf16.mxu0 0
      %1983 = vmatpush1.bf16.msra.mxu0 %v1964
      %1984 = vmatprep.subr.bf16.mxu0 0
      %1985 = vmatpush1.bf16.msra.mxu0 %v1965
      %1986 = vmatprep.subr.bf16.mxu0 0
      %1987 = vmatpush1.bf16.msra.mxu0 %v1966
      %1988 = vmatprep.subr.bf16.mxu0 0
      %1989 = vmatpush1.bf16.msra.mxu0 %v1967
      %1990 = vmatprep.subr.bf16.mxu0 0
      %1991 = vmatpush1.bf16.msra.mxu0 %v1968
      %1992 = vmatprep.subr.bf16.mxu0 0
      %1993 = vmatpush1.bf16.msra.mxu0 %v1969
      %1994 = vmatprep.subr.bf16.mxu0 0
      %1995 = vmatpush1.bf16.msra.mxu0 0
      %1996 = vmatprep.subr.bf16.mxu0 0
      %1997 = vmatpush1.bf16.msra.mxu0 0
      %1998 = vmatprep.subr.bf16.mxu0 0
      %1999 = vmatpush1.bf16.msra.mxu0 0
      %2000 = vmatprep.subr.bf16.mxu0 0
      %2001 = vmatpush1.bf16.msra.mxu0 0
      %2002 = vmatprep.subr.bf16.mxu0 0
      %2003 = vmatpush1.bf16.msra.mxu0 0
      %2004 = vmatprep.subr.bf16.mxu0 0
      %2005 = vmatpush1.bf16.msra.mxu0 0
      %2006 = vmatprep.subr.bf16.mxu0 0
      %2007 = vmatpush1.bf16.msra.mxu0 0
      %2008 = vmatprep.subr.bf16.mxu0 0
      %2009 = vmatpush1.bf16.msra.mxu0 0
      %2010 = vmatprep.mubr.bf16.mxu0 0
      %2011 = vmatmul.mubr.bf16.gmra.mrb[0].mxu0 %v1897
      %v2012 = vpop.f32.mrb[0].mxu0
      %v2013 = vadd.f32 %v1928, %v2012
      %v2014 = vpop.f32.mrb[0].mxu0
      %v2015 = vpop.f32.mrb[0].mxu0
      %v2016 = vadd.f32 %v1928, %v2015
      %v2017 = vpop.f32.mrb[0].mxu0
      %2018 = vmatprep.mubr.bf16.mxu0 0
      %2019 = vmatmul.mubr.bf16.gmra.mrb[0].mxu0 %v1898
      %v2020 = vpop.f32.mrb[0].mxu0
      %v2021 = vadd.f32 %v1928, %v2020
      %v2022 = vpop.f32.mrb[0].mxu0
      %v2023 = vpop.f32.mrb[0].mxu0
      %v2024 = vadd.f32 %v1928, %v2023
      %v2025 = vpop.f32.mrb[0].mxu0
      %2026 = vmatprep.mubr.bf16.mxu0 0
      %2027 = vmatmul.mubr.bf16.gmra.mrb[0].mxu0 %v1899
      %v2028 = vpop.f32.mrb[0].mxu0
      %v2029 = vadd.f32 %v1928, %v2028
      %v2030 = vpop.f32.mrb[0].mxu0
      %v2031 = vpop.f32.mrb[0].mxu0
      %v2032 = vadd.f32 %v1928, %v2031
      %v2033 = vpop.f32.mrb[0].mxu0
      %2034 = vmatprep.mubr.bf16.mxu0 0
      %2035 = vmatmul.mubr.bf16.gmra.mrb[0].mxu0 %v1900
      %v2036 = vpop.f32.mrb[0].mxu0
      %v2037 = vadd.f32 %v1928, %v2036
      %v2038 = vpop.f32.mrb[0].mxu0
      %v2039 = vpop.f32.mrb[0].mxu0
      %v2040 = vadd.f32 %v1928, %v2039
      %v2041 = vpop.f32.mrb[0].mxu0
      %2042 = vmatprep.mubr.bf16.mxu0 0
      %2043 = vmatmul.mubr.bf16.gmra.mrb[0].mxu0 %v1901
      %v2044 = vpop.f32.mrb[0].mxu0
      %v2045 = vadd.f32 %v1928, %v2044
      %v2046 = vpop.f32.mrb[0].mxu0
      %v2047 = vpop.f32.mrb[0].mxu0
      %v2048 = vadd.f32 %v1928, %v2047
      %v2049 = vpop.f32.mrb[0].mxu0
      %2050 = vmatprep.mubr.bf16.mxu0 0
      %2051 = vmatmul.mubr.bf16.gmra.mrb[0].mxu0 %v1902
      %v2052 = vpop.f32.mrb[0].mxu0
      %v2053 = vadd.f32 %v1928, %v2052
      %v2054 = vpop.f32.mrb[0].mxu0
      %v2055 = vpop.f32.mrb[0].mxu0
      %v2056 = vadd.f32 %v1928, %v2055
      %v2057 = vpop.f32.mrb[0].mxu0
      %2058 = vmatprep.mubr.bf16.mxu0 0
      %2059 = vmatmul.mubr.bf16.gmra.mrb[0].mxu0 %v1903
      %v2060 = vpop.f32.mrb[0].mxu0
      %v2061 = vadd.f32 %v1928, %v2060
      %v2062 = vpop.f32.mrb[0].mxu0
      %v2063 = vpop.f32.mrb[0].mxu0
      %v2064 = vadd.f32 %v1928, %v2063
      %v2065 = vpop.f32.mrb[0].mxu0
      %2066 = vmatprep.mubr.bf16.mxu0 0
      %2067 = vmatmul.mubr.bf16.gmra.mrb[0].mxu0 %v1904
      %v2068 = vpop.f32.mrb[0].mxu0
      %v2069 = vadd.f32 %v1928, %v2068
      %v2070 = vpop.f32.mrb[0].mxu0
      %v2071 = vpop.f32.mrb[0].mxu0
      %v2072 = vadd.f32 %v1928, %v2071
      %v2073 = vpop.f32.mrb[0].mxu0
      %2074 = vdwg.mxu0
      %v2075 = vmax.f32 %v2013, 0.0
      %v2076 = vmax.f32 %v2016, 0.0
      %v2077 = vmax.f32 %v2021, 0.0
      %v2078 = vmax.f32 %v2024, 0.0
      %v2079 = vmax.f32 %v2029, 0.0
      %v2080 = vmax.f32 %v2032, 0.0
      %v2081 = vmax.f32 %v2037, 0.0
      %v2082 = vmax.f32 %v2040, 0.0
      %v2083 = vmax.f32 %v2045, 0.0
      %v2084 = vmax.f32 %v2048, 0.0
      %v2085 = vmax.f32 %v2053, 0.0
      %v2086 = vmax.f32 %v2056, 0.0
      %v2087 = vmax.f32 %v2061, 0.0
      %v2088 = vmax.f32 %v2064, 0.0
      %v2089 = vmax.f32 %v2069, 0.0
      %v2090 = vmax.f32 %v2072, 0.0
      %v2091 = vpack.c.bf16 %v2076, %v2075
      %v2092 = vpack.c.bf16 %v2078, %v2077
      %v2093 = vpack.c.bf16 %v2080, %v2079
      %v2094 = vpack.c.bf16 %v2082, %v2081
      %v2095 = vpack.c.bf16 %v2084, %v2083
      %v2096 = vpack.c.bf16 %v2086, %v2085
      %v2097 = vpack.c.bf16 %v2088, %v2087
      %v2098 = vpack.c.bf16 %v2090, %v2089
      %s2099 = scalar_lea.vmem %s6, 320
      %v2100 = vld [vmem:[%s2099] sm:$0xf]
      %v2101 = vld [vmem:[%s2099 + $0x4] sm:$0xf]
      %v2102 = vld [vmem:[%s2099 + $0x8] sm:$0xf]
      %v2103 = vld [vmem:[%s2099 + $0xc] sm:$0xf]
      %v2104 = vld [vmem:[%s2099 + $0x10] sm:$0xf]
      %v2105 = vld [vmem:[%s2099 + $0x14] sm:$0xf]
      %v2106 = vld [vmem:[%s2099 + $0x18] sm:$0xf]
      %v2107 = vld [vmem:[%s2099 + $0x1c] sm:$0xf]
      %v2108 = vld [vmem:[%s2099 + $0x20] sm:$0xf]
      %v2109 = vld [vmem:[%s2099 + $0x24] sm:$0xf]
      %v2110 = vld [vmem:[%s2099 + $0x28] sm:$0xf]
      %v2111 = vld [vmem:[%s2099 + $0x2c] sm:$0xf]
      %v2112 = vld [vmem:[%s2099 + $0x30] sm:$0xf]
      %v2113 = vld [vmem:[%s2099 + $0x34] sm:$0xf]
      %v2114 = vld [vmem:[%s2099 + $0x38] sm:$0xf]
      %v2115 = vld [vmem:[%s2099 + $0x3c] sm:$0xf]
      %s2116 = scalar_lea.vmem %s7, 5
      %v2117 = vld [vmem:[%s2116] sm:$0x1]
      %v2119 = vlaneseq
      %v2120 = vshrl.u32 %v2119, 7
      %v2121 = vsub.s32 0, %v2120
      %v2122 = vrot.slane %v2117, %v2121
      %v2140 = vunpack.c.l.b16 %v2100
      %v2141 = vunpack.c.l.b16 %v2101
      %v2142 = vunpack.c.l.b16 %v2102
      %v2143 = vunpack.c.l.b16 %v2103
      %v2144 = vunpack.c.l.b16 %v2104
      %v2145 = vunpack.c.l.b16 %v2105
      %v2146 = vunpack.c.l.b16 %v2106
      %v2147 = vunpack.c.l.b16 %v2107
      %v2148 = vunpack.c.l.b16 %v2108
      %v2149 = vunpack.c.l.b16 %v2109
      %v2150 = vunpack.c.l.b16 %v2110
      %v2151 = vunpack.c.l.b16 %v2111
      %v2152 = vunpack.c.l.b16 %v2112
      %v2153 = vunpack.c.l.b16 %v2113
      %v2154 = vunpack.c.l.b16 %v2114
      %v2155 = vunpack.c.l.b16 %v2115
      %v2156 = vpack.c.b16 %v2141, %v2140
      %v2157 = vpack.c.b16 %v2143, %v2142
      %v2158 = vpack.c.b16 %v2145, %v2144
      %v2159 = vpack.c.b16 %v2147, %v2146
      %v2160 = vpack.c.b16 %v2149, %v2148
      %v2161 = vpack.c.b16 %v2151, %v2150
      %v2162 = vpack.c.b16 %v2153, %v2152
      %v2163 = vpack.c.b16 %v2155, %v2154
      %2172 = vmatprep.subr.bf16.mxu0 0
      %2173 = vmatpush1.bf16.msra.mxu0 %v2156
      %2174 = vmatprep.subr.bf16.mxu0 0
      %2175 = vmatpush1.bf16.msra.mxu0 %v2157
      %2176 = vmatprep.subr.bf16.mxu0 0
      %2177 = vmatpush1.bf16.msra.mxu0 %v2158
      %2178 = vmatprep.subr.bf16.mxu0 0
      %2179 = vmatpush1.bf16.msra.mxu0 %v2159
      %2180 = vmatprep.subr.bf16.mxu0 0
      %2181 = vmatpush1.bf16.msra.mxu0 %v2160
      %2182 = vmatprep.subr.bf16.mxu0 0
      %2183 = vmatpush1.bf16.msra.mxu0 %v2161
      %2184 = vmatprep.subr.bf16.mxu0 0
      %2185 = vmatpush1.bf16.msra.mxu0 %v2162
      %2186 = vmatprep.subr.bf16.mxu0 0
      %2187 = vmatpush1.bf16.msra.mxu0 %v2163
      %2188 = vmatprep.subr.bf16.mxu0 0
      %2189 = vmatpush1.bf16.msra.mxu0 0
      %2190 = vmatprep.subr.bf16.mxu0 0
      %2191 = vmatpush1.bf16.msra.mxu0 0
      %2192 = vmatprep.subr.bf16.mxu0 0
      %2193 = vmatpush1.bf16.msra.mxu0 0
      %2194 = vmatprep.subr.bf16.mxu0 0
      %2195 = vmatpush1.bf16.msra.mxu0 0
      %2196 = vmatprep.subr.bf16.mxu0 0
      %2197 = vmatpush1.bf16.msra.mxu0 0
      %2198 = vmatprep.subr.bf16.mxu0 0
      %2199 = vmatpush1.bf16.msra.mxu0 0
      %2200 = vmatprep.subr.bf16.mxu0 0
      %2201 = vmatpush1.bf16.msra.mxu0 0
      %2202 = vmatprep.subr.bf16.mxu0 0
      %2203 = vmatpush1.bf16.msra.mxu0 0
      %2204 = vmatprep.mubr.bf16.mxu0 0
      %2205 = vmatmul.mubr.bf16.gmra.mrb[0].mxu0 %v2091
      %v2206 = vpop.f32.mrb[0].mxu0
      %v2207 = vadd.f32 %v2122, %v2206
      %v2208 = vpop.f32.mrb[0].mxu0
      %v2209 = vpop.f32.mrb[0].mxu0
      %v2210 = vadd.f32 %v2122, %v2209
      %v2211 = vpop.f32.mrb[0].mxu0
      %2212 = vmatprep.mubr.bf16.mxu0 0
      %2213 = vmatmul.mubr.bf16.gmra.mrb[0].mxu0 %v2092
      %v2214 = vpop.f32.mrb[0].mxu0
      %v2215 = vadd.f32 %v2122, %v2214
      %v2216 = vpop.f32.mrb[0].mxu0
      %v2217 = vpop.f32.mrb[0].mxu0
      %v2218 = vadd.f32 %v2122, %v2217
      %v2219 = vpop.f32.mrb[0].mxu0
      %2220 = vmatprep.mubr.bf16.mxu0 0
      %2221 = vmatmul.mubr.bf16.gmra.mrb[0].mxu0 %v2093
      %v2222 = vpop.f32.mrb[0].mxu0
      %v2223 = vadd.f32 %v2122, %v2222
      %v2224 = vpop.f32.mrb[0].mxu0
      %v2225 = vpop.f32.mrb[0].mxu0
      %v2226 = vadd.f32 %v2122, %v2225
      %v2227 = vpop.f32.mrb[0].mxu0
      %2228 = vmatprep.mubr.bf16.mxu0 0
      %2229 = vmatmul.mubr.bf16.gmra.mrb[0].mxu0 %v2094
      %v2230 = vpop.f32.mrb[0].mxu0
      %v2231 = vadd.f32 %v2122, %v2230
      %v2232 = vpop.f32.mrb[0].mxu0
      %v2233 = vpop.f32.mrb[0].mxu0
      %v2234 = vadd.f32 %v2122, %v2233
      %v2235 = vpop.f32.mrb[0].mxu0
      %2236 = vmatprep.mubr.bf16.mxu0 0
      %2237 = vmatmul.mubr.bf16.gmra.mrb[0].mxu0 %v2095
      %v2238 = vpop.f32.mrb[0].mxu0
      %v2239 = vadd.f32 %v2122, %v2238
      %v2240 = vpop.f32.mrb[0].mxu0
      %v2241 = vpop.f32.mrb[0].mxu0
      %v2242 = vadd.f32 %v2122, %v2241
      %v2243 = vpop.f32.mrb[0].mxu0
      %2244 = vmatprep.mubr.bf16.mxu0 0
      %2245 = vmatmul.mubr.bf16.gmra.mrb[0].mxu0 %v2096
      %v2246 = vpop.f32.mrb[0].mxu0
      %v2247 = vadd.f32 %v2122, %v2246
      %v2248 = vpop.f32.mrb[0].mxu0
      %v2249 = vpop.f32.mrb[0].mxu0
      %v2250 = vadd.f32 %v2122, %v2249
      %v2251 = vpop.f32.mrb[0].mxu0
      %2252 = vmatprep.mubr.bf16.mxu0 0
      %2253 = vmatmul.mubr.bf16.gmra.mrb[0].mxu0 %v2097
      %v2254 = vpop.f32.mrb[0].mxu0
      %v2255 = vadd.f32 %v2122, %v2254
      %v2256 = vpop.f32.mrb[0].mxu0
      %v2257 = vpop.f32.mrb[0].mxu0
      %v2258 = vadd.f32 %v2122, %v2257
      %v2259 = vpop.f32.mrb[0].mxu0
      %2260 = vmatprep.mubr.bf16.mxu0 0
      %2261 = vmatmul.mubr.bf16.gmra.mrb[0].mxu0 %v2098
      %v2262 = vpop.f32.mrb[0].mxu0
      %v2263 = vadd.f32 %v2122, %v2262
      %v2264 = vpop.f32.mrb[0].mxu0
      %v2265 = vpop.f32.mrb[0].mxu0
      %v2266 = vadd.f32 %v2122, %v2265
      %v2267 = vpop.f32.mrb[0].mxu0
      %2268 = vdwg.mxu0
      %v2269 = vmax.f32 %v2207, 0.0
      %v2270 = vmax.f32 %v2210, 0.0
      %v2271 = vmax.f32 %v2215, 0.0
      %v2272 = vmax.f32 %v2218, 0.0
      %v2273 = vmax.f32 %v2223, 0.0
      %v2274 = vmax.f32 %v2226, 0.0
      %v2275 = vmax.f32 %v2231, 0.0
      %v2276 = vmax.f32 %v2234, 0.0
      %v2277 = vmax.f32 %v2239, 0.0
      %v2278 = vmax.f32 %v2242, 0.0
      %v2279 = vmax.f32 %v2247, 0.0
      %v2280 = vmax.f32 %v2250, 0.0
      %v2281 = vmax.f32 %v2255, 0.0
      %v2282 = vmax.f32 %v2258, 0.0
      %v2283 = vmax.f32 %v2263, 0.0
      %v2284 = vmax.f32 %v2266, 0.0
      %v2285 = vpack.c.bf16 %v2270, %v2269
      %v2286 = vpack.c.bf16 %v2272, %v2271
      %v2287 = vpack.c.bf16 %v2274, %v2273
      %v2288 = vpack.c.bf16 %v2276, %v2275
      %v2289 = vpack.c.bf16 %v2278, %v2277
      %v2290 = vpack.c.bf16 %v2280, %v2279
      %v2291 = vpack.c.bf16 %v2282, %v2281
      %v2292 = vpack.c.bf16 %v2284, %v2283
      %s2293 = scalar_lea.vmem %s6, 384
      %v2294 = vld [vmem:[%s2293] sm:$0xf]
      %v2295 = vld [vmem:[%s2293 + $0x4] sm:$0xf]
      %v2296 = vld [vmem:[%s2293 + $0x8] sm:$0xf]
      %v2297 = vld [vmem:[%s2293 + $0xc] sm:$0xf]
      %v2298 = vld [vmem:[%s2293 + $0x10] sm:$0xf]
      %v2299 = vld [vmem:[%s2293 + $0x14] sm:$0xf]
      %v2300 = vld [vmem:[%s2293 + $0x18] sm:$0xf]
      %v2301 = vld [vmem:[%s2293 + $0x1c] sm:$0xf]
      %v2302 = vld [vmem:[%s2293 + $0x20] sm:$0xf]
      %v2303 = vld [vmem:[%s2293 + $0x24] sm:$0xf]
      %v2304 = vld [vmem:[%s2293 + $0x28] sm:$0xf]
      %v2305 = vld [vmem:[%s2293 + $0x2c] sm:$0xf]
      %v2306 = vld [vmem:[%s2293 + $0x30] sm:$0xf]
      %v2307 = vld [vmem:[%s2293 + $0x34] sm:$0xf]
      %v2308 = vld [vmem:[%s2293 + $0x38] sm:$0xf]
      %v2309 = vld [vmem:[%s2293 + $0x3c] sm:$0xf]
      %s2310 = scalar_lea.vmem %s7, 6
      %v2311 = vld [vmem:[%s2310] sm:$0x1]
      %v2313 = vlaneseq
      %v2314 = vshrl.u32 %v2313, 7
      %v2315 = vsub.s32 0, %v2314
      %v2316 = vrot.slane %v2311, %v2315
      %v2334 = vunpack.c.l.b16 %v2294
      %v2335 = vunpack.c.l.b16 %v2295
      %v2336 = vunpack.c.l.b16 %v2296
      %v2337 = vunpack.c.l.b16 %v2297
      %v2338 = vunpack.c.l.b16 %v2298
      %v2339 = vunpack.c.l.b16 %v2299
      %v2340 = vunpack.c.l.b16 %v2300
      %v2341 = vunpack.c.l.b16 %v2301
      %v2342 = vunpack.c.l.b16 %v2302
      %v2343 = vunpack.c.l.b16 %v2303
      %v2344 = vunpack.c.l.b16 %v2304
      %v2345 = vunpack.c.l.b16 %v2305
      %v2346 = vunpack.c.l.b16 %v2306
      %v2347 = vunpack.c.l.b16 %v2307
      %v2348 = vunpack.c.l.b16 %v2308
      %v2349 = vunpack.c.l.b16 %v2309
      %v2350 = vpack.c.b16 %v2335, %v2334
      %v2351 = vpack.c.b16 %v2337, %v2336
      %v2352 = vpack.c.b16 %v2339, %v2338
      %v2353 = vpack.c.b16 %v2341, %v2340
      %v2354 = vpack.c.b16 %v2343, %v2342
      %v2355 = vpack.c.b16 %v2345, %v2344
      %v2356 = vpack.c.b16 %v2347, %v2346
      %v2357 = vpack.c.b16 %v2349, %v2348
      %2366 = vmatprep.subr.bf16.mxu0 0
      %2367 = vmatpush1.bf16.msra.mxu0 %v2350
      %2368 = vmatprep.subr.bf16.mxu0 0
      %2369 = vmatpush1.bf16.msra.mxu0 %v2351
      %2370 = vmatprep.subr.bf16.mxu0 0
      %2371 = vmatpush1.bf16.msra.mxu0 %v2352
      %2372 = vmatprep.subr.bf16.mxu0 0
      %2373 = vmatpush1.bf16.msra.mxu0 %v2353
      %2374 = vmatprep.subr.bf16.mxu0 0
      %2375 = vmatpush1.bf16.msra.mxu0 %v2354
      %2376 = vmatprep.subr.bf16.mxu0 0
      %2377 = vmatpush1.bf16.msra.mxu0 %v2355
      %2378 = vmatprep.subr.bf16.mxu0 0
      %2379 = vmatpush1.bf16.msra.mxu0 %v2356
      %2380 = vmatprep.subr.bf16.mxu0 0
      %2381 = vmatpush1.bf16.msra.mxu0 %v2357
      %2382 = vmatprep.subr.bf16.mxu0 0
      %2383 = vmatpush1.bf16.msra.mxu0 0
      %2384 = vmatprep.subr.bf16.mxu0 0
      %2385 = vmatpush1.bf16.msra.mxu0 0
      %2386 = vmatprep.subr.bf16.mxu0 0
      %2387 = vmatpush1.bf16.msra.mxu0 0
      %2388 = vmatprep.subr.bf16.mxu0 0
      %2389 = vmatpush1.bf16.msra.mxu0 0
      %2390 = vmatprep.subr.bf16.mxu0 0
      %2391 = vmatpush1.bf16.msra.mxu0 0
      %2392 = vmatprep.subr.bf16.mxu0 0
      %2393 = vmatpush1.bf16.msra.mxu0 0
      %2394 = vmatprep.subr.bf16.mxu0 0
      %2395 = vmatpush1.bf16.msra.mxu0 0
      %2396 = vmatprep.subr.bf16.mxu0 0
      %2397 = vmatpush1.bf16.msra.mxu0 0
      %2398 = vmatprep.mubr.bf16.mxu0 0
      %2399 = vmatmul.mubr.bf16.gmra.mrb[0].mxu0 %v2285
      %v2400 = vpop.f32.mrb[0].mxu0
      %v2401 = vadd.f32 %v2316, %v2400
      %v2402 = vpop.f32.mrb[0].mxu0
      %v2403 = vpop.f32.mrb[0].mxu0
      %v2404 = vadd.f32 %v2316, %v2403
      %v2405 = vpop.f32.mrb[0].mxu0
      %2406 = vmatprep.mubr.bf16.mxu0 0
      %2407 = vmatmul.mubr.bf16.gmra.mrb[0].mxu0 %v2286
      %v2408 = vpop.f32.mrb[0].mxu0
      %v2409 = vadd.f32 %v2316, %v2408
      %v2410 = vpop.f32.mrb[0].mxu0
      %v2411 = vpop.f32.mrb[0].mxu0
      %v2412 = vadd.f32 %v2316, %v2411
      %v2413 = vpop.f32.mrb[0].mxu0
      %2414 = vmatprep.mubr.bf16.mxu0 0
      %2415 = vmatmul.mubr.bf16.gmra.mrb[0].mxu0 %v2287
      %v2416 = vpop.f32.mrb[0].mxu0
      %v2417 = vadd.f32 %v2316, %v2416
      %v2418 = vpop.f32.mrb[0].mxu0
      %v2419 = vpop.f32.mrb[0].mxu0
      %v2420 = vadd.f32 %v2316, %v2419
      %v2421 = vpop.f32.mrb[0].mxu0
      %2422 = vmatprep.mubr.bf16.mxu0 0
      %2423 = vmatmul.mubr.bf16.gmra.mrb[0].mxu0 %v2288
      %v2424 = vpop.f32.mrb[0].mxu0
      %v2425 = vadd.f32 %v2316, %v2424
      %v2426 = vpop.f32.mrb[0].mxu0
      %v2427 = vpop.f32.mrb[0].mxu0
      %v2428 = vadd.f32 %v2316, %v2427
      %v2429 = vpop.f32.mrb[0].mxu0
      %2430 = vmatprep.mubr.bf16.mxu0 0
      %2431 = vmatmul.mubr.bf16.gmra.mrb[0].mxu0 %v2289
      %v2432 = vpop.f32.mrb[0].mxu0
      %v2433 = vadd.f32 %v2316, %v2432
      %v2434 = vpop.f32.mrb[0].mxu0
      %v2435 = vpop.f32.mrb[0].mxu0
      %v2436 = vadd.f32 %v2316, %v2435
      %v2437 = vpop.f32.mrb[0].mxu0
      %2438 = vmatprep.mubr.bf16.mxu0 0
      %2439 = vmatmul.mubr.bf16.gmra.mrb[0].mxu0 %v2290
      %v2440 = vpop.f32.mrb[0].mxu0
      %v2441 = vadd.f32 %v2316, %v2440
      %v2442 = vpop.f32.mrb[0].mxu0
      %v2443 = vpop.f32.mrb[0].mxu0
      %v2444 = vadd.f32 %v2316, %v2443
      %v2445 = vpop.f32.mrb[0].mxu0
      %2446 = vmatprep.mubr.bf16.mxu0 0
      %2447 = vmatmul.mubr.bf16.gmra.mrb[0].mxu0 %v2291
      %v2448 = vpop.f32.mrb[0].mxu0
      %v2449 = vadd.f32 %v2316, %v2448
      %v2450 = vpop.f32.mrb[0].mxu0
      %v2451 = vpop.f32.mrb[0].mxu0
      %v2452 = vadd.f32 %v2316, %v2451
      %v2453 = vpop.f32.mrb[0].mxu0
      %2454 = vmatprep.mubr.bf16.mxu0 0
      %2455 = vmatmul.mubr.bf16.gmra.mrb[0].mxu0 %v2292
      %v2456 = vpop.f32.mrb[0].mxu0
      %v2457 = vadd.f32 %v2316, %v2456
      %v2458 = vpop.f32.mrb[0].mxu0
      %v2459 = vpop.f32.mrb[0].mxu0
      %v2460 = vadd.f32 %v2316, %v2459
      %v2461 = vpop.f32.mrb[0].mxu0
      %2462 = vdwg.mxu0
      %v2463 = vmax.f32 %v2401, 0.0
      %v2464 = vmax.f32 %v2404, 0.0
      %v2465 = vmax.f32 %v2409, 0.0
      %v2466 = vmax.f32 %v2412, 0.0
      %v2467 = vmax.f32 %v2417, 0.0
      %v2468 = vmax.f32 %v2420, 0.0
      %v2469 = vmax.f32 %v2425, 0.0
      %v2470 = vmax.f32 %v2428, 0.0
      %v2471 = vmax.f32 %v2433, 0.0
      %v2472 = vmax.f32 %v2436, 0.0
      %v2473 = vmax.f32 %v2441, 0.0
      %v2474 = vmax.f32 %v2444, 0.0
      %v2475 = vmax.f32 %v2449, 0.0
      %v2476 = vmax.f32 %v2452, 0.0
      %v2477 = vmax.f32 %v2457, 0.0
      %v2478 = vmax.f32 %v2460, 0.0
      %v2479 = vpack.c.bf16 %v2464, %v2463
      %v2480 = vpack.c.bf16 %v2466, %v2465
      %v2481 = vpack.c.bf16 %v2468, %v2467
      %v2482 = vpack.c.bf16 %v2470, %v2469
      %v2483 = vpack.c.bf16 %v2472, %v2471
      %v2484 = vpack.c.bf16 %v2474, %v2473
      %v2485 = vpack.c.bf16 %v2476, %v2475
      %v2486 = vpack.c.bf16 %v2478, %v2477
      %v2487 = vld [vmem:[%s8] sm:$0xf]
      %v2488 = vld [vmem:[%s8 + $0x4] sm:$0xf]
      %v2489 = vld [vmem:[%s8 + $0x8] sm:$0xf]
      %v2490 = vld [vmem:[%s8 + $0xc] sm:$0xf]
      %v2491 = vld [vmem:[%s8 + $0x10] sm:$0xf]
      %v2492 = vld [vmem:[%s8 + $0x14] sm:$0xf]
      %v2493 = vld [vmem:[%s8 + $0x18] sm:$0xf]
      %v2494 = vld [vmem:[%s8 + $0x1c] sm:$0xf]
      %v2495 = vld [vmem:[%s8 + $0x20] sm:$0xf]
      %v2496 = vld [vmem:[%s8 + $0x24] sm:$0xf]
      %v2497 = vld [vmem:[%s8 + $0x28] sm:$0xf]
      %v2498 = vld [vmem:[%s8 + $0x2c] sm:$0xf]
      %v2499 = vld [vmem:[%s8 + $0x30] sm:$0xf]
      %v2500 = vld [vmem:[%s8 + $0x34] sm:$0xf]
      %v2501 = vld [vmem:[%s8 + $0x38] sm:$0xf]
      %v2502 = vld [vmem:[%s8 + $0x3c] sm:$0xf]
      %v2503 = vld [vmem:[%s9] sm:$0x1]
      %v2505 = vlaneseq
      %v2506 = vshrl.u32 %v2505, 7
      %v2507 = vsub.s32 0, %v2506
      %v2508 = vrot.slane %v2503, %v2507
      %v2526 = vunpack.c.l.b16 %v2487
      %v2527 = vunpack.c.l.b16 %v2488
      %v2528 = vunpack.c.l.b16 %v2489
      %v2529 = vunpack.c.l.b16 %v2490
      %v2530 = vunpack.c.l.b16 %v2491
      %v2531 = vunpack.c.l.b16 %v2492
      %v2532 = vunpack.c.l.b16 %v2493
      %v2533 = vunpack.c.l.b16 %v2494
      %v2534 = vunpack.c.l.b16 %v2495
      %v2535 = vunpack.c.l.b16 %v2496
      %v2536 = vunpack.c.l.b16 %v2497
      %v2537 = vunpack.c.l.b16 %v2498
      %v2538 = vunpack.c.l.b16 %v2499
      %v2539 = vunpack.c.l.b16 %v2500
      %v2540 = vunpack.c.l.b16 %v2501
      %v2541 = vunpack.c.l.b16 %v2502
      %v2542 = vpack.c.b16 %v2527, %v2526
      %v2543 = vpack.c.b16 %v2529, %v2528
      %v2544 = vpack.c.b16 %v2531, %v2530
      %v2545 = vpack.c.b16 %v2533, %v2532
      %v2546 = vpack.c.b16 %v2535, %v2534
      %v2547 = vpack.c.b16 %v2537, %v2536
      %v2548 = vpack.c.b16 %v2539, %v2538
      %v2549 = vpack.c.b16 %v2541, %v2540
      %2558 = vmatprep.subr.bf16.mxu0 0
      %2559 = vmatpush1.bf16.msra.mxu0 %v2542
      %2560 = vmatprep.subr.bf16.mxu0 0
      %2561 = vmatpush1.bf16.msra.mxu0 %v2543
      %2562 = vmatprep.subr.bf16.mxu0 0
      %2563 = vmatpush1.bf16.msra.mxu0 %v2544
      %2564 = vmatprep.subr.bf16.mxu0 0
      %2565 = vmatpush1.bf16.msra.mxu0 %v2545
      %2566 = vmatprep.subr.bf16.mxu0 0
      %2567 = vmatpush1.bf16.msra.mxu0 %v2546
      %2568 = vmatprep.subr.bf16.mxu0 0
      %2569 = vmatpush1.bf16.msra.mxu0 %v2547
      %2570 = vmatprep.subr.bf16.mxu0 0
      %2571 = vmatpush1.bf16.msra.mxu0 %v2548
      %2572 = vmatprep.subr.bf16.mxu0 0
      %2573 = vmatpush1.bf16.msra.mxu0 %v2549
      %2574 = vmatprep.subr.bf16.mxu0 0
      %2575 = vmatpush1.bf16.msra.mxu0 0
      %2576 = vmatprep.subr.bf16.mxu0 0
      %2577 = vmatpush1.bf16.msra.mxu0 0
      %2578 = vmatprep.subr.bf16.mxu0 0
      %2579 = vmatpush1.bf16.msra.mxu0 0
      %2580 = vmatprep.subr.bf16.mxu0 0
      %2581 = vmatpush1.bf16.msra.mxu0 0
      %2582 = vmatprep.subr.bf16.mxu0 0
      %2583 = vmatpush1.bf16.msra.mxu0 0
      %2584 = vmatprep.subr.bf16.mxu0 0
      %2585 = vmatpush1.bf16.msra.mxu0 0
      %2586 = vmatprep.subr.bf16.mxu0 0
      %2587 = vmatpush1.bf16.msra.mxu0 0
      %2588 = vmatprep.subr.bf16.mxu0 0
      %2589 = vmatpush1.bf16.msra.mxu0 0
      %2590 = vmatprep.mubr.bf16.mxu0 0
      %2591 = vmatmul.mubr.bf16.gmra.mrb[0].mxu0 %v2479
      %v2592 = vpop.f32.mrb[0].mxu0
      %v2593 = vadd.f32 %v2508, %v2592
      %v2594 = vpop.f32.mrb[0].mxu0
      %v2595 = vpop.f32.mrb[0].mxu0
      %v2596 = vadd.f32 %v2508, %v2595
      %v2597 = vpop.f32.mrb[0].mxu0
      %2598 = vmatprep.mubr.bf16.mxu0 0
      %2599 = vmatmul.mubr.bf16.gmra.mrb[0].mxu0 %v2480
      %v2600 = vpop.f32.mrb[0].mxu0
      %v2601 = vadd.f32 %v2508, %v2600
      %v2602 = vpop.f32.mrb[0].mxu0
      %v2603 = vpop.f32.mrb[0].mxu0
      %v2604 = vadd.f32 %v2508, %v2603
      %v2605 = vpop.f32.mrb[0].mxu0
      %2606 = vmatprep.mubr.bf16.mxu0 0
      %2607 = vmatmul.mubr.bf16.gmra.mrb[0].mxu0 %v2481
      %v2608 = vpop.f32.mrb[0].mxu0
      %v2609 = vadd.f32 %v2508, %v2608
      %v2610 = vpop.f32.mrb[0].mxu0
      %v2611 = vpop.f32.mrb[0].mxu0
      %v2612 = vadd.f32 %v2508, %v2611
      %v2613 = vpop.f32.mrb[0].mxu0
      %2614 = vmatprep.mubr.bf16.mxu0 0
      %2615 = vmatmul.mubr.bf16.gmra.mrb[0].mxu0 %v2482
      %v2616 = vpop.f32.mrb[0].mxu0
      %v2617 = vadd.f32 %v2508, %v2616
      %v2618 = vpop.f32.mrb[0].mxu0
      %v2619 = vpop.f32.mrb[0].mxu0
      %v2620 = vadd.f32 %v2508, %v2619
      %v2621 = vpop.f32.mrb[0].mxu0
      %2622 = vmatprep.mubr.bf16.mxu0 0
      %2623 = vmatmul.mubr.bf16.gmra.mrb[0].mxu0 %v2483
      %v2624 = vpop.f32.mrb[0].mxu0
      %v2625 = vadd.f32 %v2508, %v2624
      %v2626 = vpop.f32.mrb[0].mxu0
      %v2627 = vpop.f32.mrb[0].mxu0
      %v2628 = vadd.f32 %v2508, %v2627
      %v2629 = vpop.f32.mrb[0].mxu0
      %2630 = vmatprep.mubr.bf16.mxu0 0
      %2631 = vmatmul.mubr.bf16.gmra.mrb[0].mxu0 %v2484
      %v2632 = vpop.f32.mrb[0].mxu0
      %v2633 = vadd.f32 %v2508, %v2632
      %v2634 = vpop.f32.mrb[0].mxu0
      %v2635 = vpop.f32.mrb[0].mxu0
      %v2636 = vadd.f32 %v2508, %v2635
      %v2637 = vpop.f32.mrb[0].mxu0
      %2638 = vmatprep.mubr.bf16.mxu0 0
      %2639 = vmatmul.mubr.bf16.gmra.mrb[0].mxu0 %v2485
      %v2640 = vpop.f32.mrb[0].mxu0
      %v2641 = vadd.f32 %v2508, %v2640
      %v2642 = vpop.f32.mrb[0].mxu0
      %v2643 = vpop.f32.mrb[0].mxu0
      %v2644 = vadd.f32 %v2508, %v2643
      %v2645 = vpop.f32.mrb[0].mxu0
      %2646 = vmatprep.mubr.bf16.mxu0 0
      %2647 = vmatmul.mubr.bf16.gmra.mrb[0].mxu0 %v2486
      %v2648 = vpop.f32.mrb[0].mxu0
      %v2649 = vadd.f32 %v2508, %v2648
      %v2650 = vpop.f32.mrb[0].mxu0
      %v2651 = vpop.f32.mrb[0].mxu0
      %v2652 = vadd.f32 %v2508, %v2651
      %v2653 = vpop.f32.mrb[0].mxu0
      %2654 = vdwg.mxu0
      %v2655 = vsel %vm471, %v2593, -inf
      %2656 = vmax.xlane.f32.xlu0 %v2655
      %v2657 = vpop.xlane.xlu0 %2656
      %v2658 = vsel %vm471, %v2596, -inf
      %2659 = vmax.xlane.f32.xlu0 %v2658
      %v2660 = vpop.xlane.xlu0 %2659
      %v2661 = vsel %vm471, %v2601, -inf
      %2662 = vmax.xlane.f32.xlu0 %v2661
      %v2663 = vpop.xlane.xlu0 %2662
      %v2664 = vsel %vm471, %v2604, -inf
      %2665 = vmax.xlane.f32.xlu0 %v2664
      %v2666 = vpop.xlane.xlu0 %2665
      %v2667 = vsel %vm471, %v2609, -inf
      %2668 = vmax.xlane.f32.xlu0 %v2667
      %v2669 = vpop.xlane.xlu0 %2668
      %v2670 = vsel %vm471, %v2612, -inf
      %2671 = vmax.xlane.f32.xlu0 %v2670
      %v2672 = vpop.xlane.xlu0 %2671
      %v2673 = vsel %vm471, %v2617, -inf
      %2674 = vmax.xlane.f32.xlu0 %v2673
      %v2675 = vpop.xlane.xlu0 %2674
      %v2676 = vsel %vm471, %v2620, -inf
      %2677 = vmax.xlane.f32.xlu0 %v2676
      %v2678 = vpop.xlane.xlu0 %2677
      %v2679 = vsel %vm471, %v2625, -inf
      %2680 = vmax.xlane.f32.xlu0 %v2679
      %v2681 = vpop.xlane.xlu0 %2680
      %v2682 = vsel %vm471, %v2628, -inf
      %2683 = vmax.xlane.f32.xlu0 %v2682
      %v2684 = vpop.xlane.xlu0 %2683
      %v2685 = vsel %vm471, %v2633, -inf
      %2686 = vmax.xlane.f32.xlu0 %v2685
      %v2687 = vpop.xlane.xlu0 %2686
      %v2688 = vsel %vm471, %v2636, -inf
      %2689 = vmax.xlane.f32.xlu0 %v2688
      %v2690 = vpop.xlane.xlu0 %2689
      %v2691 = vsel %vm471, %v2641, -inf
      %2692 = vmax.xlane.f32.xlu0 %v2691
      %v2693 = vpop.xlane.xlu0 %2692
      %v2694 = vsel %vm471, %v2644, -inf
      %2695 = vmax.xlane.f32.xlu0 %v2694
      %v2696 = vpop.xlane.xlu0 %2695
      %v2697 = vsel %vm471, %v2649, -inf
      %2698 = vmax.xlane.f32.xlu0 %v2697
      %v2699 = vpop.xlane.xlu0 %2698
      %v2700 = vsel %vm471, %v2652, -inf
      %2701 = vmax.xlane.f32.xlu0 %v2700
      %v2702 = vpop.xlane.xlu0 %2701
      %v2703 = vsub.f32 %v2593, %v2657
      %v2704 = vsub.f32 %v2596, %v2660
      %v2705 = vsub.f32 %v2601, %v2663
      %v2706 = vsub.f32 %v2604, %v2666
      %v2707 = vsub.f32 %v2609, %v2669
      %v2708 = vsub.f32 %v2612, %v2672
      %v2709 = vsub.f32 %v2617, %v2675
      %v2710 = vsub.f32 %v2620, %v2678
      %v2711 = vsub.f32 %v2625, %v2681
      %v2712 = vsub.f32 %v2628, %v2684
      %v2713 = vsub.f32 %v2633, %v2687
      %v2714 = vsub.f32 %v2636, %v2690
      %v2715 = vsub.f32 %v2641, %v2693
      %v2716 = vsub.f32 %v2644, %v2696
      %v2717 = vsub.f32 %v2649, %v2699
      %v2718 = vsub.f32 %v2652, %v2702
      %v2719 = vmul.f32 %v2703, 1.442695
      %v2720 = vpow.pop %v2719
      %v2721 = vmul.f32 %v2704, 1.442695
      %v2722 = vpow.pop %v2721
      %v2723 = vmul.f32 %v2705, 1.442695
      %v2724 = vpow.pop %v2723
      %v2725 = vmul.f32 %v2706, 1.442695
      %v2726 = vpow.pop %v2725
      %v2727 = vmul.f32 %v2707, 1.442695
      %v2728 = vpow.pop %v2727
      %v2729 = vmul.f32 %v2708, 1.442695
      %v2730 = vpow.pop %v2729
      %v2731 = vmul.f32 %v2709, 1.442695
      %v2732 = vpow.pop %v2731
      %v2733 = vmul.f32 %v2710, 1.442695
      %v2734 = vpow.pop %v2733
      %v2735 = vmul.f32 %v2711, 1.442695
      %v2736 = vpow.pop %v2735
      %v2737 = vmul.f32 %v2712, 1.442695
      %v2738 = vpow.pop %v2737
      %v2739 = vmul.f32 %v2713, 1.442695
      %v2740 = vpow.pop %v2739
      %v2741 = vmul.f32 %v2714, 1.442695
      %v2742 = vpow.pop %v2741
      %v2743 = vmul.f32 %v2715, 1.442695
      %v2744 = vpow.pop %v2743
      %v2745 = vmul.f32 %v2716, 1.442695
      %v2746 = vpow.pop %v2745
      %v2747 = vmul.f32 %v2717, 1.442695
      %v2748 = vpow.pop %v2747
      %v2749 = vmul.f32 %v2718, 1.442695
      %v2750 = vpow.pop %v2749
      %v2751 = vsel %vm471, %v2720, 0.0
      %2752 = vadd.xlane.f32.xlu0 %v2751
      %v2753 = vpop.xlane.xlu0 %2752
      %v2754 = vsel %vm471, %v2722, 0.0
      %2755 = vadd.xlane.f32.xlu0 %v2754
      %v2756 = vpop.xlane.xlu0 %2755
      %v2757 = vsel %vm471, %v2724, 0.0
      %2758 = vadd.xlane.f32.xlu0 %v2757
      %v2759 = vpop.xlane.xlu0 %2758
      %v2760 = vsel %vm471, %v2726, 0.0
      %2761 = vadd.xlane.f32.xlu0 %v2760
      %v2762 = vpop.xlane.xlu0 %2761
      %v2763 = vsel %vm471, %v2728, 0.0
      %2764 = vadd.xlane.f32.xlu0 %v2763
      %v2765 = vpop.xlane.xlu0 %2764
      %v2766 = vsel %vm471, %v2730, 0.0
      %2767 = vadd.xlane.f32.xlu0 %v2766
      %v2768 = vpop.xlane.xlu0 %2767
      %v2769 = vsel %vm471, %v2732, 0.0
      %2770 = vadd.xlane.f32.xlu0 %v2769
      %v2771 = vpop.xlane.xlu0 %2770
      %v2772 = vsel %vm471, %v2734, 0.0
      %2773 = vadd.xlane.f32.xlu0 %v2772
      %v2774 = vpop.xlane.xlu0 %2773
      %v2775 = vsel %vm471, %v2736, 0.0
      %2776 = vadd.xlane.f32.xlu0 %v2775
      %v2777 = vpop.xlane.xlu0 %2776
      %v2778 = vsel %vm471, %v2738, 0.0
      %2779 = vadd.xlane.f32.xlu0 %v2778
      %v2780 = vpop.xlane.xlu0 %2779
      %v2781 = vsel %vm471, %v2740, 0.0
      %2782 = vadd.xlane.f32.xlu0 %v2781
      %v2783 = vpop.xlane.xlu0 %2782
      %v2784 = vsel %vm471, %v2742, 0.0
      %2785 = vadd.xlane.f32.xlu0 %v2784
      %v2786 = vpop.xlane.xlu0 %2785
      %v2787 = vsel %vm471, %v2744, 0.0
      %2788 = vadd.xlane.f32.xlu0 %v2787
      %v2789 = vpop.xlane.xlu0 %2788
      %v2790 = vsel %vm471, %v2746, 0.0
      %2791 = vadd.xlane.f32.xlu0 %v2790
      %v2792 = vpop.xlane.xlu0 %2791
      %v2793 = vsel %vm471, %v2748, 0.0
      %2794 = vadd.xlane.f32.xlu0 %v2793
      %v2795 = vpop.xlane.xlu0 %2794
      %v2796 = vsel %vm471, %v2750, 0.0
      %2797 = vadd.xlane.f32.xlu0 %v2796
      %v2798 = vpop.xlane.xlu0 %2797
      %v2799 = vrcp.pop %v2753
      %v2800 = vmul.f32 %v2720, %v2799
      %v2801 = vrcp.pop %v2756
      %v2802 = vmul.f32 %v2722, %v2801
      %v2803 = vrcp.pop %v2759
      %v2804 = vmul.f32 %v2724, %v2803
      %v2805 = vrcp.pop %v2762
      %v2806 = vmul.f32 %v2726, %v2805
      %v2807 = vrcp.pop %v2765
      %v2808 = vmul.f32 %v2728, %v2807
      %v2809 = vrcp.pop %v2768
      %v2810 = vmul.f32 %v2730, %v2809
      %v2811 = vrcp.pop %v2771
      %v2812 = vmul.f32 %v2732, %v2811
      %v2813 = vrcp.pop %v2774
      %v2814 = vmul.f32 %v2734, %v2813
      %v2815 = vrcp.pop %v2777
      %v2816 = vmul.f32 %v2736, %v2815
      %v2817 = vrcp.pop %v2780
      %v2818 = vmul.f32 %v2738, %v2817
      %v2819 = vrcp.pop %v2783
      %v2820 = vmul.f32 %v2740, %v2819
      %v2821 = vrcp.pop %v2786
      %v2822 = vmul.f32 %v2742, %v2821
      %v2823 = vrcp.pop %v2789
      %v2824 = vmul.f32 %v2744, %v2823
      %v2825 = vrcp.pop %v2792
      %v2826 = vmul.f32 %v2746, %v2825
      %v2827 = vrcp.pop %v2795
      %v2828 = vmul.f32 %v2748, %v2827
      %v2829 = vrcp.pop %v2798
      %v2830 = vmul.f32 %v2750, %v2829
      %2831 = vst.msk [vmem:[%s402] sm:$0xff] %vm471, %v2800
      %2832 = vst.msk [vmem:[%s402 + $0x8] sm:$0xff] %vm471, %v2802
      %2833 = vst.msk [vmem:[%s402 + $0x10] sm:$0xff] %vm471, %v2804
      %2834 = vst.msk [vmem:[%s402 + $0x18] sm:$0xff] %vm471, %v2806
      %2835 = vst.msk [vmem:[%s402 + $0x20] sm:$0xff] %vm471, %v2808
      %2836 = vst.msk [vmem:[%s402 + $0x28] sm:$0xff] %vm471, %v2810
      %2837 = vst.msk [vmem:[%s402 + $0x30] sm:$0xff] %vm471, %v2812
      %2838 = vst.msk [vmem:[%s402 + $0x38] sm:$0xff] %vm471, %v2814
      %2839 = vst.msk [vmem:[%s402 + $0x40] sm:$0xff] %vm471, %v2816
      %2840 = vst.msk [vmem:[%s402 + $0x48] sm:$0xff] %vm471, %v2818
      %2841 = vst.msk [vmem:[%s402 + $0x50] sm:$0xff] %vm471, %v2820
      %2842 = vst.msk [vmem:[%s402 + $0x58] sm:$0xff] %vm471, %v2822
      %2843 = vst.msk [vmem:[%s402 + $0x60] sm:$0xff] %vm471, %v2824
      %2844 = vst.msk [vmem:[%s402 + $0x68] sm:$0xff] %vm471, %v2826
      %2845 = vst.msk [vmem:[%s402 + $0x70] sm:$0xff] %vm471, %v2828
      %2846 = vst.msk [vmem:[%s402 + $0x78] sm:$0xff] %vm471, %v2830
      %s2847 = smul.u32 16, %s23
      %p2848 = scmp.lt.s32.totalorder %s2847, 31
      %s2849 = scalar_select %p2848, %s2847, 31
      %s2850 = smul.addr %s2849, 8
      %s2851 = scalar_lea.vmem %s10, %s2850
      %s2852 = smul.u32 16, %s23
      %p2853 = scmp.lt.s32.totalorder %s2852, 31
      %s2854 = scalar_select %p2853, %s2852, 31
      %s2855 = smul.addr %s2854, 8
      %s2856 = scalar_lea.vmem %s11, %s2855
      // Predicated region
      $region61: #{joint_flow_inst.1} parent=59 // pred_check
        %p2857 = pneg %p256
      $region62: #{joint_flow_inst.1} parent=59 // pred_check_branch
        %2859 = sbr.rel (%p2857) target = $region64
      $region63: #{joint_flow_inst.1} parent=59 // pred_region
        %s2860 = smul.u32 16, %s23
      $region64: #{joint_flow_inst.1} parent=59 // pred_fallthru
        _
      // Predicated region
      $region65: #{joint_flow_inst.1} parent=59 // pred_check
        %p2861 = pneg %p282
      $region66: #{joint_flow_inst.1} parent=59 // pred_check_branch
        %2863 = sbr.rel (%p2861) target = $region68
      $region67: #{joint_flow_inst.1} parent=59 // pred_region
        %s2864 = smul.u32 16, %s23
      $region68: #{joint_flow_inst.1} parent=59 // pred_fallthru
        _
    $region60: #{joint_flow_inst.1} parent=5 // pred_fallthru
      _
    %p2865 = scmp.le.s32.totalorder 2, %s18
    // Predicated region
    $region69: #{joint_flow_inst.1} parent=5 // pred_check
      %p2866 = pneg %p2865
    $region70: #{joint_flow_inst.1} parent=5 // pred_check_branch
      %2868 = sbr.rel (%p2866) target = $region72
    $region71: #{joint_flow_inst.1} parent=5 // pred_region
      %s2869 = ssub.s32 %s18, 2
      // Predicated region
      $region73: #{joint_flow_inst.1} parent=71 // pred_check
        %p2870 = pneg %p262
      $region74: #{joint_flow_inst.1} parent=71 // pred_check_branch
        %2872 = sbr.rel (%p2870) target = $region76
      $region75: #{joint_flow_inst.1} parent=71 // pred_region
        %s2873 = smul.u32 16, %s24
        %p2874 = scmp.lt.s32.totalorder %s2873, 31
        %s2875 = scalar_select %p2874, %s2873, 31
        %s2876 = smul.addr %s2875, 8
        %s2877 = scalar_lea.vmem %s10, %s2876
      $region76: #{joint_flow_inst.1} parent=71 // pred_fallthru
        _
      // Predicated region
      $region77: #{joint_flow_inst.1} parent=71 // pred_check
        %p2878 = pneg %p288
      $region78: #{joint_flow_inst.1} parent=71 // pred_check_branch
        %2880 = sbr.rel (%p2878) target = $region80
      $region79: #{joint_flow_inst.1} parent=71 // pred_region
        %s2881 = smul.u32 16, %s24
        %p2882 = scmp.lt.s32.totalorder %s2881, 31
        %s2883 = scalar_select %p2882, %s2881, 31
        %s2884 = smul.addr %s2883, 8
        %s2885 = scalar_lea.vmem %s11, %s2884
      $region80: #{joint_flow_inst.1} parent=71 // pred_fallthru
        _
    $region72: #{joint_flow_inst.1} parent=5 // pred_fallthru
      _
  $region6: #{joint_flow_inst.1} parent=0 // loop_footer
    %s22 = sadd.s32 1, %s18
  $region7: #{joint_flow_inst.1} parent=0 // loop_footer_branch
    %17 = sbr.rel target = $region3
  $region8: #{joint_flow_inst.1} parent=0 // loop_exit
    _

</llo_original>
